<compile_context>
chip_gen: v6e
topology: v6e:2x2x1
jax: 0.10.0
libtpu: 0.0.40
codegen_flags: <defaults>
</compile_context>

<pallas_src>
import functools

import jax
import jax.numpy as jnp
from jax import lax
from jax.experimental import pallas as pl
from jax.experimental.pallas import tpu as pltpu


def _mha_kernel(x_ref, wqkv_ref, bqkv_ref, wp_ref, bp_ref, o_ref,
                qkv_ref, acc_ref, *,
                num_heads, seq_pad, seq_real, seqs_per_block, scaling,
                compute_dtype):
    # x_ref:    (rows, E)    rows = bt * n_pad  (bt whole padded sequences)
    # wqkv_ref: (E, 3E)      pre-transposed, fused [Wq; Wk; Wv]
    # bqkv_ref: (1, 3E)      fused bias (f32)
    # wp_ref:   (E, E)       pre-transposed projection weight
    # bp_ref:   (1, E)       projection bias (f32)
    # o_ref:    (rows, E)
    # qkv_ref:  (rows, 3E)   compute_dtype VMEM scratch (fused projection)
    # acc_ref:  (rows, E)    compute_dtype VMEM scratch (concatenated heads)
    e = wp_ref.shape[0]
    d = e // num_heads
    n = seq_pad

    # 1. Fused Q/K/V projection for the whole slab: one MXU matmul with f32
    #    accumulation, written once to the compute_dtype scratch.
    qkv_ref[...] = (
        jnp.dot(x_ref[...], wqkv_ref[...], preferred_element_type=jnp.float32)
        + bqkv_ref[...]).astype(qkv_ref.dtype)

    # Static key-padding mask (only when the sequence was padded to n).
    masked = seq_real < n
    if masked:
        key_valid = lax.broadcasted_iota(jnp.int32, (n, n), 1) < seq_real

    approx = compute_dtype != jnp.dtype(jnp.float32)

    def seq_body(s, carry):
        r0 = pl.multiple_of(s * n, 8)            # sublane-aligned row offset
        head_outs = []
        for h in range(num_heads):               # heads are few: unrolled
            c0 = h * d
            qh = qkv_ref[pl.ds(r0, n), c0:c0 + d]
            kh = qkv_ref[pl.ds(r0, n), e + c0:e + c0 + d]
            vh = qkv_ref[pl.ds(r0, n), 2 * e + c0:2 * e + c0 + d]

            # q @ k^T without materializing a transpose (contract head dim).
            energy = lax.dot_general(qh, kh, (((1,), (1,)), ((), ())),
                                     preferred_element_type=jnp.float32)
            if masked:
                energy = jnp.where(key_valid, energy, -1e30)

            # Numerically stable softmax in f32; divide -> EUP reciprocal
            # (exact on the f32 path), post-softmax scaling folded in.
            m = jnp.max(energy, axis=-1, keepdims=True)
            p = jnp.exp(energy - m)
            denom = jnp.sum(p, axis=-1, keepdims=True)
            att = p * (scaling * pl.reciprocal(denom, approx=approx))
            # att_drop has p = 0.0 -> identity.

            head_outs.append(
                jnp.dot(att.astype(compute_dtype), vh,
                        preferred_element_type=jnp.float32))      # (n, d)

        # 'b h n d -> b n (h d)': concatenate heads along lanes, then ONE
        # lane-dense (n, E) store per sequence (no per-head masked stores).
        out_s = jnp.concatenate(head_outs, axis=-1)
        acc_ref[pl.ds(r0, n), :] = out_s.astype(acc_ref.dtype)
        return carry

    lax.fori_loop(0, seqs_per_block, seq_body, 0)

    # 2. Output projection over the whole slab (column layout of acc_ref is
    #    already 'b n (h d)').
    o_ref[...] = (
        jnp.dot(acc_ref[...], wp_ref[...], preferred_element_type=jnp.float32)
        + bp_ref[...]).astype(o_ref.dtype)


def _pick_rows(b, n_pad, e, cb, ob, vmem_cap):
    """VMEM-budget-aware choice of sequences-per-block and vmem limit."""
    per_row = (2 * e * cb       # x block (double buffered)
               + 2 * e * ob     # out block (double buffered)
               + 3 * e * cb     # qkv scratch
               + e * cb         # acc scratch
               + 3 * e * 4)     # transient f32 QKV matmul result
    fixed = 8 * e * e * cb + 32 * e          # weights+biases, worst-case 2x buf
    budget = int(vmem_cap * 0.4)
    max_rows = max(n_pad, (budget - fixed) // per_row)
    target_rows = int(min(1024, max_rows))   # amortize per-grid-step overhead

    bt = max(1, min(b, target_rows // n_pad))
    while b % bt:
        bt -= 1
    # Keep at least 2 grid steps when the batch allows (software pipelining;
    # v7x has 2 TensorCores sharded over the "parallel" axis).
    if b >= 2 and b // bt < 2:
        cand = bt - 1
        while cand >= 1 and b % cand:
            cand -= 1
        if cand >= 1:
            bt = cand

    rows = bt * n_pad
    need = fixed + per_row * rows
    vmem_limit = int(min(vmem_cap * 0.98, max(2 * need, 32 * 1024 * 1024)))
    return bt, rows, vmem_limit


def multi_head_attention(x, params, *, num_heads, compute_dtype=jnp.bfloat16):
    """x: (B, N, E).  params: dict of wq,bq,wk,bk,wv,bv,wp,bp (PyTorch Linear
    convention: W is (out, in), y = x @ W.T + b)."""
    b, n, e = x.shape
    assert e % num_heads == 0
    d = e // num_heads
    scaling = float(d ** (-0.5))
    compute_dtype = jnp.dtype(compute_dtype)
    out_dtype = x.dtype

    # Pad the sequence dim to a sublane multiple (e.g. Swin windows 49 -> 56)
    # so row blocks stay 8-aligned without collapsing the grid to one step.
    n_pad = -(-n // 8) * 8
    if n_pad != n:
        x = jnp.pad(x, ((0, 0), (0, n_pad - n), (0, 0)))

    cb = compute_dtype.itemsize
    ob = jnp.dtype(out_dtype).itemsize
    try:
        vmem_cap = int(getattr(pltpu.get_tpu_info(), "vmem_capacity_bytes",
                               64 * 1024 * 1024))
    except Exception:
        vmem_cap = 64 * 1024 * 1024          # v7x-safe default (64 MiB / TC)
    bt, rows, vmem_limit = _pick_rows(b, n_pad, e, cb, ob, vmem_cap)
    grid = (b // bt,)

    # Fuse + pre-transpose weights once in XLA (no transposes in the kernel).
    wqkv_t = jnp.concatenate([params["wq"], params["wk"], params["wv"]],
                             axis=0).T.astype(compute_dtype)        # (E, 3E)
    bqkv = jnp.concatenate([params["bq"], params["bk"], params["bv"]]
                           ).reshape(1, 3 * e).astype(jnp.float32)
    wp_t = params["wp"].T.astype(compute_dtype)                     # (E, E)
    bp = params["bp"].reshape(1, e).astype(jnp.float32)

    # Present x / out as lane-dense 2-D slabs (B*Npad, E).
    x2d = x.reshape(b * n_pad, e).astype(compute_dtype)

    kernel = functools.partial(
        _mha_kernel, num_heads=num_heads, seq_pad=n_pad, seq_real=n,
        seqs_per_block=bt, scaling=scaling, compute_dtype=compute_dtype)

    flops = (2 * b * n_pad * e * 3 * e            # fused QKV projection
             + 4 * b * num_heads * n_pad * n_pad * d   # QK^T and att@V
             + 2 * b * n_pad * e * e)             # output projection
    cost = pl.CostEstimate(
        flops=int(flops),
        transcendentals=int(b * num_heads * n_pad * (n_pad + 1)),
        bytes_accessed=int(b * n_pad * e * cb         # x (compute_dtype)
                           + b * n_pad * e * ob       # output
                           + 4 * e * e * cb           # weights
                           + 4 * e * 4))              # biases (f32)

    def run(buffered_weights):
        # Grid-constant operands: a single VMEM buffer is enough.
        wmode = {"pipeline_mode": pl.Buffered(1)} if buffered_weights else {}
        grid_spec = pltpu.PrefetchScalarGridSpec(
            num_scalar_prefetch=0,
            grid=grid,
            in_specs=[
                pl.BlockSpec((rows, e), lambda i: (i, 0)),             # x slab
                pl.BlockSpec((e, 3 * e), lambda i: (0, 0), **wmode),   # Wqkv^T
                pl.BlockSpec((1, 3 * e), lambda i: (0, 0), **wmode),   # bqkv
                pl.BlockSpec((e, e), lambda i: (0, 0), **wmode),       # Wp^T
                pl.BlockSpec((1, e), lambda i: (0, 0), **wmode),       # bp
            ],
            out_specs=pl.BlockSpec((rows, e), lambda i: (i, 0)),
            scratch_shapes=[
                pltpu.VMEM((rows, 3 * e), compute_dtype),   # fused qkv slab
                pltpu.VMEM((rows, e), compute_dtype),       # head outputs
            ],
        )
        return pl.pallas_call(
            kernel,
            out_shape=jax.ShapeDtypeStruct((b * n_pad, e), out_dtype),
            grid_spec=grid_spec,
            compiler_params=pltpu.CompilerParams(
                dimension_semantics=("parallel",),
                vmem_limit_bytes=vmem_limit),
            cost_estimate=cost,
        )(x2d, wqkv_t, bqkv, wp_t, bp)

    try:
        out2d = run(True)      # single-buffer the grid-constant weights
    except Exception:
        out2d = run(False)     # fallback if Buffered(1) is unsupported

    out = out2d.reshape(b, n_pad, e)
    return out[:, :n, :] if n_pad != n else out


def _reference(x, params, *, num_heads):
    """Pure-JAX (f32) reference reproducing the PyTorch forward exactly."""
    b, n, e = x.shape
    d = e // num_heads
    scaling = d ** (-0.5)

    def lin(t, w, bias):
        return jnp.einsum("bne,oe->bno", t, w) + bias

    q = lin(x, params["wq"], params["bq"]).reshape(b, n, num_heads, d).transpose(0, 2, 1, 3)
    k = lin(x, params["wk"], params["bk"]).reshape(b, n, num_heads, d).transpose(0, 2, 1, 3)
    v = lin(x, params["wv"], params["bv"]).reshape(b, n, num_heads, d).transpose(0, 2, 1, 3)
    energy = jnp.einsum("bhqd,bhkd->bhqk", q, k)
    att = jax.nn.softmax(energy, axis=-1) * scaling
    out = jnp.einsum("bhal,bhlv->bhav", att, v)
    out = out.transpose(0, 2, 1, 3).reshape(b, n, e)
    return lin(out, params["wp"], params["bp"])


if __name__ == "__main__":
    B, N, E, H = 2, 8, 32, 4   # batch, seq, emb_size, num_heads (head_dim = 8)

    key = jax.random.PRNGKey(0)
    keys = jax.random.split(key, 9)
    scale = 1.0 / jnp.sqrt(E)
    params = {
        "wq": jax.random.normal(keys[0], (E, E), jnp.float32) * scale,
        "bq": jax.random.normal(keys[1], (E,), jnp.float32) * 0.1,
        "wk": jax.random.normal(keys[2], (E, E), jnp.float32) * scale,
        "bk": jax.random.normal(keys[3], (E,), jnp.float32) * 0.1,
        "wv": jax.random.normal(keys[4], (E, E), jnp.float32) * scale,
        "bv": jax.random.normal(keys[5], (E,), jnp.float32) * 0.1,
        "wp": jax.random.normal(keys[6], (E, E), jnp.float32) * scale,
        "bp": jax.random.normal(keys[7], (E,), jnp.float32) * 0.1,
    }
    x = jax.random.normal(keys[8], (B, N, E), jnp.float32)

    ref = _reference(x, params, num_heads=H)

    # Exact-precision path (f32 operands, exact reciprocal).
    out_f32 = jax.block_until_ready(
        multi_head_attention(x, params, num_heads=H, compute_dtype=jnp.float32))
    assert out_f32.shape == (B, N, E)
    assert jnp.allclose(out_f32, ref, atol=5e-3, rtol=5e-3)

    # Throughput path (bf16 operands, f32 accumulation + f32 softmax).
    out_bf16 = jax.block_until_ready(
        multi_head_attention(x, params, num_heads=H, compute_dtype=jnp.bfloat16))
    assert out_bf16.shape == (B, N, E)
    assert jnp.allclose(out_bf16, ref, atol=1e-1, rtol=1e-1)

    # Sequence length not divisible by 8 (Swin-window-like): exercises the
    # sequence-padding + key-mask path.
    x6 = x[:, :6, :]
    ref6 = _reference(x6, params, num_heads=H)
    out6 = jax.block_until_ready(
        multi_head_attention(x6, params, num_heads=H, compute_dtype=jnp.float32))
    assert out6.shape == (B, 6, E)
    assert jnp.allclose(out6, ref6, atol=5e-3, rtol=5e-3)

    print("KERNEL_OK")
</pallas_src>

<mosaic_0001>
module attributes {stable_mosaic.version = 11 : i64} {
  func.func @_mha_kernel(%arg0: i32, %arg1: memref<8x32xf32, #tpu.memory_space<vmem>>, %arg2: memref<32x96xf32, #tpu.memory_space<vmem>>, %arg3: memref<1x96xf32, #tpu.memory_space<vmem>>, %arg4: memref<32x32xf32, #tpu.memory_space<vmem>>, %arg5: memref<1x32xf32, #tpu.memory_space<vmem>>, %arg6: memref<8x32xf32, #tpu.memory_space<vmem>>, %arg7: memref<8x96xf32, #tpu.memory_space<vmem>>, %arg8: memref<8x32xf32, #tpu.memory_space<vmem>>) attributes {dimension_semantics = [#tpu.dimension_semantics<parallel>], iteration_bounds = array<i64: 2>, scalar_prefetch = 0 : i64, scratch_operands = 2 : i64, tpu.core_type = #tpu.core_type<tc>, window_params = [{transform_indices = @transform_0, window_bounds = array<i64: 8, 32>}, {pipeline_mode = #tpu.pipeline_mode<synchronous>, transform_indices = @transform_1, window_bounds = array<i64: 32, 96>}, {pipeline_mode = #tpu.pipeline_mode<synchronous>, transform_indices = @transform_2, window_bounds = array<i64: 1, 96>}, {pipeline_mode = #tpu.pipeline_mode<synchronous>, transform_indices = @transform_3, window_bounds = array<i64: 32, 32>}, {pipeline_mode = #tpu.pipeline_mode<synchronous>, transform_indices = @transform_4, window_bounds = array<i64: 1, 32>}, {transform_indices = @transform_5, window_bounds = array<i64: 8, 32>}]} {
    %c0 = arith.constant 0 : index
    %c0_0 = arith.constant 0 : index
    %0 = vector.load %arg1[%c0, %c0_0] : memref<8x32xf32, #tpu.memory_space<vmem>>, vector<8x32xf32>
    %c0_1 = arith.constant 0 : index
    %c0_2 = arith.constant 0 : index
    %1 = vector.load %arg2[%c0_1, %c0_2] : memref<32x96xf32, #tpu.memory_space<vmem>>, vector<32x96xf32>
    %cst = arith.constant dense<0.000000e+00> : vector<8x96xf32>
    %2 = tpu.matmul %0, %1, %cst {dimension_numbers = #tpu.dot_dimension_numbers<[1], [0], [0], [1], [0, 0, 1, 1], [], []>} : vector<8x32xf32>, vector<32x96xf32>, vector<8x96xf32> -> vector<8x96xf32>
    %c0_3 = arith.constant 0 : index
    %c0_4 = arith.constant 0 : index
    %3 = vector.load %arg3[%c0_3, %c0_4] : memref<1x96xf32, #tpu.memory_space<vmem>>, vector<1x96xf32>
    %4 = vector.broadcast %3 : vector<1x96xf32> to vector<8x96xf32>
    %5 = arith.addf %2, %4 : vector<8x96xf32>
    %c0_5 = arith.constant 0 : index
    %c0_6 = arith.constant 0 : index
    %6 = vector.load %arg7[%c0_5, %c0_6] : memref<8x96xf32, #tpu.memory_space<vmem>>, vector<8x96xf32>
    tpu.vector_store %arg7[%c0_5, %c0_6], %5 {strides = array<i32>} : memref<8x96xf32, #tpu.memory_space<vmem>>, vector<8x96xf32>,
    %c0_i32 = arith.constant 0 : i32
    %c8_i32 = arith.constant 8 : i32
    %7 = arith.muli %c0_i32, %c8_i32 : i32
    %8 = tpu.assume_multiple %7, 8 : i32
    %9 = arith.index_cast %8 : i32 to index
    %c0_7 = arith.constant 0 : index
    %10 = vector.load %arg7[%9, %c0_7] : memref<8x96xf32, #tpu.memory_space<vmem>>, vector<8x8xf32>
    %11 = arith.index_cast %8 : i32 to index
    %c32 = arith.constant 32 : index
    %12 = vector.load %arg7[%11, %c32] : memref<8x96xf32, #tpu.memory_space<vmem>>, vector<8x8xf32>
    %13 = arith.index_cast %8 : i32 to index
    %c64 = arith.constant 64 : index
    %14 = vector.load %arg7[%13, %c64] : memref<8x96xf32, #tpu.memory_space<vmem>>, vector<8x8xf32>
    %cst_8 = arith.constant dense<0.000000e+00> : vector<8x8xf32>
    %15 = tpu.matmul %10, %12, %cst_8 {dimension_numbers = #tpu.dot_dimension_numbers<[1], [1], [0], [0], [0, 0, 1, 0], [], []>} : vector<8x8xf32>, vector<8x8xf32>, vector<8x8xf32> -> vector<8x8xf32>
    %cst_9 = arith.constant dense<0xFF800000> : vector<8xf32>
    %16 = vector.multi_reduction <maximumf>, %15, %cst_9 [1] : vector<8x8xf32> to vector<8xf32>
    %17 = vector.shape_cast %16 : vector<8xf32> to vector<8x1xf32>
    %18 = vector.broadcast %17 : vector<8x1xf32> to vector<8x8xf32>
    %19 = arith.subf %15, %18 : vector<8x8xf32>
    %20 = math.exp %19 : vector<8x8xf32>
    %cst_10 = arith.constant dense<0.000000e+00> : vector<8xf32>
    %21 = vector.multi_reduction <add>, %20, %cst_10 [1] : vector<8x8xf32> to vector<8xf32>
    %22 = vector.shape_cast %21 : vector<8xf32> to vector<8x1xf32>
    %23 = tpu.reciprocal %22 : vector<8x1xf32> -> vector<8x1xf32>
    %cst_11 = arith.constant 0.353553385 : f32
    %24 = vector.broadcast %cst_11 : f32 to vector<8x1xf32>
    %25 = arith.mulf %24, %23 : vector<8x1xf32>
    %26 = vector.broadcast %25 : vector<8x1xf32> to vector<8x8xf32>
    %27 = arith.mulf %20, %26 : vector<8x8xf32>
    %cst_12 = arith.constant dense<0.000000e+00> : vector<8x8xf32>
    %28 = tpu.matmul %27, %14, %cst_12 {dimension_numbers = #tpu.dot_dimension_numbers<[1], [0], [0], [1], [0, 0, 1, 1], [], []>} : vector<8x8xf32>, vector<8x8xf32>, vector<8x8xf32> -> vector<8x8xf32>
    %29 = arith.index_cast %8 : i32 to index
    %c8 = arith.constant 8 : index
    %30 = vector.load %arg7[%29, %c8] : memref<8x96xf32, #tpu.memory_space<vmem>>, vector<8x8xf32>
    %31 = arith.index_cast %8 : i32 to index
    %c40 = arith.constant 40 : index
    %32 = vector.load %arg7[%31, %c40] : memref<8x96xf32, #tpu.memory_space<vmem>>, vector<8x8xf32>
    %33 = arith.index_cast %8 : i32 to index
    %c72 = arith.constant 72 : index
    %34 = vector.load %arg7[%33, %c72] : memref<8x96xf32, #tpu.memory_space<vmem>>, vector<8x8xf32>
    %cst_13 = arith.constant dense<0.000000e+00> : vector<8x8xf32>
    %35 = tpu.matmul %30, %32, %cst_13 {dimension_numbers = #tpu.dot_dimension_numbers<[1], [1], [0], [0], [0, 0, 1, 0], [], []>} : vector<8x8xf32>, vector<8x8xf32>, vector<8x8xf32> -> vector<8x8xf32>
    %cst_14 = arith.constant dense<0xFF800000> : vector<8xf32>
    %36 = vector.multi_reduction <maximumf>, %35, %cst_14 [1] : vector<8x8xf32> to vector<8xf32>
    %37 = vector.shape_cast %36 : vector<8xf32> to vector<8x1xf32>
    %38 = vector.broadcast %37 : vector<8x1xf32> to vector<8x8xf32>
    %39 = arith.subf %35, %38 : vector<8x8xf32>
    %40 = math.exp %39 : vector<8x8xf32>
    %cst_15 = arith.constant dense<0.000000e+00> : vector<8xf32>
    %41 = vector.multi_reduction <add>, %40, %cst_15 [1] : vector<8x8xf32> to vector<8xf32>
    %42 = vector.shape_cast %41 : vector<8xf32> to vector<8x1xf32>
    %43 = tpu.reciprocal %42 : vector<8x1xf32> -> vector<8x1xf32>
    %cst_16 = arith.constant 0.353553385 : f32
    %44 = vector.broadcast %cst_16 : f32 to vector<8x1xf32>
    %45 = arith.mulf %44, %43 : vector<8x1xf32>
    %46 = vector.broadcast %45 : vector<8x1xf32> to vector<8x8xf32>
    %47 = arith.mulf %40, %46 : vector<8x8xf32>
    %cst_17 = arith.constant dense<0.000000e+00> : vector<8x8xf32>
    %48 = tpu.matmul %47, %34, %cst_17 {dimension_numbers = #tpu.dot_dimension_numbers<[1], [0], [0], [1], [0, 0, 1, 1], [], []>} : vector<8x8xf32>, vector<8x8xf32>, vector<8x8xf32> -> vector<8x8xf32>
    %49 = arith.index_cast %8 : i32 to index
    %c16 = arith.constant 16 : index
    %50 = vector.load %arg7[%49, %c16] : memref<8x96xf32, #tpu.memory_space<vmem>>, vector<8x8xf32>
    %51 = arith.index_cast %8 : i32 to index
    %c48 = arith.constant 48 : index
    %52 = vector.load %arg7[%51, %c48] : memref<8x96xf32, #tpu.memory_space<vmem>>, vector<8x8xf32>
    %53 = arith.index_cast %8 : i32 to index
    %c80 = arith.constant 80 : index
    %54 = vector.load %arg7[%53, %c80] : memref<8x96xf32, #tpu.memory_space<vmem>>, vector<8x8xf32>
    %cst_18 = arith.constant dense<0.000000e+00> : vector<8x8xf32>
    %55 = tpu.matmul %50, %52, %cst_18 {dimension_numbers = #tpu.dot_dimension_numbers<[1], [1], [0], [0], [0, 0, 1, 0], [], []>} : vector<8x8xf32>, vector<8x8xf32>, vector<8x8xf32> -> vector<8x8xf32>
    %cst_19 = arith.constant dense<0xFF800000> : vector<8xf32>
    %56 = vector.multi_reduction <maximumf>, %55, %cst_19 [1] : vector<8x8xf32> to vector<8xf32>
    %57 = vector.shape_cast %56 : vector<8xf32> to vector<8x1xf32>
    %58 = vector.broadcast %57 : vector<8x1xf32> to vector<8x8xf32>
    %59 = arith.subf %55, %58 : vector<8x8xf32>
    %60 = math.exp %59 : vector<8x8xf32>
    %cst_20 = arith.constant dense<0.000000e+00> : vector<8xf32>
    %61 = vector.multi_reduction <add>, %60, %cst_20 [1] : vector<8x8xf32> to vector<8xf32>
    %62 = vector.shape_cast %61 : vector<8xf32> to vector<8x1xf32>
    %63 = tpu.reciprocal %62 : vector<8x1xf32> -> vector<8x1xf32>
    %cst_21 = arith.constant 0.353553385 : f32
    %64 = vector.broadcast %cst_21 : f32 to vector<8x1xf32>
    %65 = arith.mulf %64, %63 : vector<8x1xf32>
    %66 = vector.broadcast %65 : vector<8x1xf32> to vector<8x8xf32>
    %67 = arith.mulf %60, %66 : vector<8x8xf32>
    %cst_22 = arith.constant dense<0.000000e+00> : vector<8x8xf32>
    %68 = tpu.matmul %67, %54, %cst_22 {dimension_numbers = #tpu.dot_dimension_numbers<[1], [0], [0], [1], [0, 0, 1, 1], [], []>} : vector<8x8xf32>, vector<8x8xf32>, vector<8x8xf32> -> vector<8x8xf32>
    %69 = arith.index_cast %8 : i32 to index
    %c24 = arith.constant 24 : index
    %70 = vector.load %arg7[%69, %c24] : memref<8x96xf32, #tpu.memory_space<vmem>>, vector<8x8xf32>
    %71 = arith.index_cast %8 : i32 to index
    %c56 = arith.constant 56 : index
    %72 = vector.load %arg7[%71, %c56] : memref<8x96xf32, #tpu.memory_space<vmem>>, vector<8x8xf32>
    %73 = arith.index_cast %8 : i32 to index
    %c88 = arith.constant 88 : index
    %74 = vector.load %arg7[%73, %c88] : memref<8x96xf32, #tpu.memory_space<vmem>>, vector<8x8xf32>
    %cst_23 = arith.constant dense<0.000000e+00> : vector<8x8xf32>
    %75 = tpu.matmul %70, %72, %cst_23 {dimension_numbers = #tpu.dot_dimension_numbers<[1], [1], [0], [0], [0, 0, 1, 0], [], []>} : vector<8x8xf32>, vector<8x8xf32>, vector<8x8xf32> -> vector<8x8xf32>
    %cst_24 = arith.constant dense<0xFF800000> : vector<8xf32>
    %76 = vector.multi_reduction <maximumf>, %75, %cst_24 [1] : vector<8x8xf32> to vector<8xf32>
    %77 = vector.shape_cast %76 : vector<8xf32> to vector<8x1xf32>
    %78 = vector.broadcast %77 : vector<8x1xf32> to vector<8x8xf32>
    %79 = arith.subf %75, %78 : vector<8x8xf32>
    %80 = math.exp %79 : vector<8x8xf32>
    %cst_25 = arith.constant dense<0.000000e+00> : vector<8xf32>
    %81 = vector.multi_reduction <add>, %80, %cst_25 [1] : vector<8x8xf32> to vector<8xf32>
    %82 = vector.shape_cast %81 : vector<8xf32> to vector<8x1xf32>
    %83 = tpu.reciprocal %82 : vector<8x1xf32> -> vector<8x1xf32>
    %cst_26 = arith.constant 0.353553385 : f32
    %84 = vector.broadcast %cst_26 : f32 to vector<8x1xf32>
    %85 = arith.mulf %84, %83 : vector<8x1xf32>
    %86 = vector.broadcast %85 : vector<8x1xf32> to vector<8x8xf32>
    %87 = arith.mulf %80, %86 : vector<8x8xf32>
    %cst_27 = arith.constant dense<0.000000e+00> : vector<8x8xf32>
    %88 = tpu.matmul %87, %74, %cst_27 {dimension_numbers = #tpu.dot_dimension_numbers<[1], [0], [0], [1], [0, 0, 1, 1], [], []>} : vector<8x8xf32>, vector<8x8xf32>, vector<8x8xf32> -> vector<8x8xf32>
    %89 = tpu.concatenate %28, %48, %68, %88 in 1 : vector<8x8xf32>, vector<8x8xf32>, vector<8x8xf32>, vector<8x8xf32> -> vector<8x32xf32>
    %90 = arith.index_cast %8 : i32 to index
    %c0_28 = arith.constant 0 : index
    %91 = vector.load %arg8[%90, %c0_28] : memref<8x32xf32, #tpu.memory_space<vmem>>, vector<8x32xf32>
    tpu.vector_store %arg8[%90, %c0_28], %89 {strides = array<i32>} : memref<8x32xf32, #tpu.memory_space<vmem>>, vector<8x32xf32>,
    %c1_i32 = arith.constant 1 : i32
    %c0_29 = arith.constant 0 : index
    %c0_30 = arith.constant 0 : index
    %92 = vector.load %arg8[%c0_29, %c0_30] : memref<8x32xf32, #tpu.memory_space<vmem>>, vector<8x32xf32>
    %c0_31 = arith.constant 0 : index
    %c0_32 = arith.constant 0 : index
    %93 = vector.load %arg4[%c0_31, %c0_32] : memref<32x32xf32, #tpu.memory_space<vmem>>, vector<32x32xf32>
    %cst_33 = arith.constant dense<0.000000e+00> : vector<8x32xf32>
    %94 = tpu.matmul %92, %93, %cst_33 {dimension_numbers = #tpu.dot_dimension_numbers<[1], [0], [0], [1], [0, 0, 1, 1], [], []>} : vector<8x32xf32>, vector<32x32xf32>, vector<8x32xf32> -> vector<8x32xf32>
    %c0_34 = arith.constant 0 : index
    %c0_35 = arith.constant 0 : index
    %95 = vector.load %arg5[%c0_34, %c0_35] : memref<1x32xf32, #tpu.memory_space<vmem>>, vector<1x32xf32>
    %96 = vector.broadcast %95 : vector<1x32xf32> to vector<8x32xf32>
    %97 = arith.addf %94, %96 : vector<8x32xf32>
    %c0_36 = arith.constant 0 : index
    %c0_37 = arith.constant 0 : index
    %98 = vector.load %arg6[%c0_36, %c0_37] : memref<8x32xf32, #tpu.memory_space<vmem>>, vector<8x32xf32>
    tpu.vector_store %arg6[%c0_36, %c0_37], %97 {strides = array<i32>} : memref<8x32xf32, #tpu.memory_space<vmem>>, vector<8x32xf32>,
    return
  }
  func.func @transform_0(%arg0: i32) -> (i32, i32) {
    %c0_i32 = arith.constant 0 : i32
    %c0_i32_0 = arith.constant 0 : i32
    return %arg0, %c0_i32 : i32, i32
  }
  func.func @transform_1(%arg0: i32) -> (i32, i32) {
    %c0_i32 = arith.constant 0 : i32
    %c0_i32_0 = arith.constant 0 : i32
    %c0_i32_1 = arith.constant 0 : i32
    return %c0_i32, %c0_i32_0 : i32, i32
  }
  func.func @transform_2(%arg0: i32) -> (i32, i32) {
    %c0_i32 = arith.constant 0 : i32
    %c0_i32_0 = arith.constant 0 : i32
    %c0_i32_1 = arith.constant 0 : i32
    return %c0_i32, %c0_i32_0 : i32, i32
  }
  func.func @transform_3(%arg0: i32) -> (i32, i32) {
    %c0_i32 = arith.constant 0 : i32
    %c0_i32_0 = arith.constant 0 : i32
    %c0_i32_1 = arith.constant 0 : i32
    return %c0_i32, %c0_i32_0 : i32, i32
  }
  func.func @transform_4(%arg0: i32) -> (i32, i32) {
    %c0_i32 = arith.constant 0 : i32
    %c0_i32_0 = arith.constant 0 : i32
    %c0_i32_1 = arith.constant 0 : i32
    return %c0_i32, %c0_i32_0 : i32, i32
  }
  func.func @transform_5(%arg0: i32) -> (i32, i32) {
    %c0_i32 = arith.constant 0 : i32
    %c0_i32_0 = arith.constant 0 : i32
    return %arg0, %c0_i32 : i32, i32
  }
}

module attributes {stable_mosaic.version = 11 : i64} {
  func.func @_mha_kernel(%arg0: i32, %arg1: memref<8x32xf32, #tpu.memory_space<vmem>>, %arg2: memref<32x96xf32, #tpu.memory_space<vmem>>, %arg3: memref<1x96xf32, #tpu.memory_space<vmem>>, %arg4: memref<32x32xf32, #tpu.memory_space<vmem>>, %arg5: memref<1x32xf32, #tpu.memory_space<vmem>>, %arg6: memref<8x32xf32, #tpu.memory_space<vmem>>, %arg7: memref<8x96xf32, #tpu.memory_space<vmem>>, %arg8: memref<8x32xf32, #tpu.memory_space<vmem>>) attributes {dimension_semantics = [#tpu.dimension_semantics<parallel>], iteration_bounds = array<i64: 2>, scalar_prefetch = 0 : i64, scratch_operands = 2 : i64, tpu.core_type = #tpu.core_type<tc>, window_params = [{transform_indices = @transform_0, window_bounds = array<i64: 8, 32>}, {pipeline_mode = #tpu.pipeline_mode<synchronous>, transform_indices = @transform_1, window_bounds = array<i64: 32, 96>}, {pipeline_mode = #tpu.pipeline_mode<synchronous>, transform_indices = @transform_2, window_bounds = array<i64: 1, 96>}, {pipeline_mode = #tpu.pipeline_mode<synchronous>, transform_indices = @transform_3, window_bounds = array<i64: 32, 32>}, {pipeline_mode = #tpu.pipeline_mode<synchronous>, transform_indices = @transform_4, window_bounds = array<i64: 1, 32>}, {transform_indices = @transform_5, window_bounds = array<i64: 8, 32>}]} {
    %c0 = arith.constant 0 : index
    %c0_0 = arith.constant 0 : index
    %0 = vector.load %arg1[%c0, %c0_0] : memref<8x32xf32, #tpu.memory_space<vmem>>, vector<8x32xf32>
    %c0_1 = arith.constant 0 : index
    %c0_2 = arith.constant 0 : index
    %1 = vector.load %arg2[%c0_1, %c0_2] : memref<32x96xf32, #tpu.memory_space<vmem>>, vector<32x96xf32>
    %cst = arith.constant dense<0.000000e+00> : vector<8x96xf32>
    %2 = tpu.matmul %0, %1, %cst {dimension_numbers = #tpu.dot_dimension_numbers<[1], [0], [0], [1], [0, 0, 1, 1], [], []>} : vector<8x32xf32>, vector<32x96xf32>, vector<8x96xf32> -> vector<8x96xf32>
    %c0_3 = arith.constant 0 : index
    %c0_4 = arith.constant 0 : index
    %3 = vector.load %arg3[%c0_3, %c0_4] : memref<1x96xf32, #tpu.memory_space<vmem>>, vector<1x96xf32>
    %4 = vector.broadcast %3 : vector<1x96xf32> to vector<8x96xf32>
    %5 = arith.addf %2, %4 : vector<8x96xf32>
    %c0_5 = arith.constant 0 : index
    %c0_6 = arith.constant 0 : index
    %6 = vector.load %arg7[%c0_5, %c0_6] : memref<8x96xf32, #tpu.memory_space<vmem>>, vector<8x96xf32>
    tpu.vector_store %arg7[%c0_5, %c0_6], %5 {strides = array<i32>} : memref<8x96xf32, #tpu.memory_space<vmem>>, vector<8x96xf32>,
    %c0_i32 = arith.constant 0 : i32
    %c8_i32 = arith.constant 8 : i32
    %7 = arith.muli %c0_i32, %c8_i32 : i32
    %8 = tpu.assume_multiple %7, 8 : i32
    %9 = arith.index_cast %8 : i32 to index
    %c0_7 = arith.constant 0 : index
    %10 = vector.load %arg7[%9, %c0_7] : memref<8x96xf32, #tpu.memory_space<vmem>>, vector<8x8xf32>
    %11 = arith.index_cast %8 : i32 to index
    %c32 = arith.constant 32 : index
    %12 = vector.load %arg7[%11, %c32] : memref<8x96xf32, #tpu.memory_space<vmem>>, vector<8x8xf32>
    %13 = arith.index_cast %8 : i32 to index
    %c64 = arith.constant 64 : index
    %14 = vector.load %arg7[%13, %c64] : memref<8x96xf32, #tpu.memory_space<vmem>>, vector<8x8xf32>
    %cst_8 = arith.constant dense<0.000000e+00> : vector<8x8xf32>
    %15 = tpu.matmul %10, %12, %cst_8 {dimension_numbers = #tpu.dot_dimension_numbers<[1], [1], [0], [0], [0, 0, 1, 0], [], []>} : vector<8x8xf32>, vector<8x8xf32>, vector<8x8xf32> -> vector<8x8xf32>
    %cst_9 = arith.constant dense<0xFF800000> : vector<8xf32>
    %16 = vector.multi_reduction <maximumf>, %15, %cst_9 [1] : vector<8x8xf32> to vector<8xf32>
    %17 = vector.shape_cast %16 : vector<8xf32> to vector<8x1xf32>
    %18 = vector.broadcast %17 : vector<8x1xf32> to vector<8x8xf32>
    %19 = arith.subf %15, %18 : vector<8x8xf32>
    %20 = math.exp %19 : vector<8x8xf32>
    %cst_10 = arith.constant dense<0.000000e+00> : vector<8xf32>
    %21 = vector.multi_reduction <add>, %20, %cst_10 [1] : vector<8x8xf32> to vector<8xf32>
    %22 = vector.shape_cast %21 : vector<8xf32> to vector<8x1xf32>
    %23 = tpu.reciprocal %22 : vector<8x1xf32> -> vector<8x1xf32>
    %cst_11 = arith.constant 0.353553385 : f32
    %24 = vector.broadcast %cst_11 : f32 to vector<8x1xf32>
    %25 = arith.mulf %24, %23 : vector<8x1xf32>
    %26 = vector.broadcast %25 : vector<8x1xf32> to vector<8x8xf32>
    %27 = arith.mulf %20, %26 : vector<8x8xf32>
    %cst_12 = arith.constant dense<0.000000e+00> : vector<8x8xf32>
    %28 = tpu.matmul %27, %14, %cst_12 {dimension_numbers = #tpu.dot_dimension_numbers<[1], [0], [0], [1], [0, 0, 1, 1], [], []>} : vector<8x8xf32>, vector<8x8xf32>, vector<8x8xf32> -> vector<8x8xf32>
    %29 = arith.index_cast %8 : i32 to index
    %c8 = arith.constant 8 : index
    %30 = vector.load %arg7[%29, %c8] : memref<8x96xf32, #tpu.memory_space<vmem>>, vector<8x8xf32>
    %31 = arith.index_cast %8 : i32 to index
    %c40 = arith.constant 40 : index
    %32 = vector.load %arg7[%31, %c40] : memref<8x96xf32, #tpu.memory_space<vmem>>, vector<8x8xf32>
    %33 = arith.index_cast %8 : i32 to index
    %c72 = arith.constant 72 : index
    %34 = vector.load %arg7[%33, %c72] : memref<8x96xf32, #tpu.memory_space<vmem>>, vector<8x8xf32>
    %cst_13 = arith.constant dense<0.000000e+00> : vector<8x8xf32>
    %35 = tpu.matmul %30, %32, %cst_13 {dimension_numbers = #tpu.dot_dimension_numbers<[1], [1], [0], [0], [0, 0, 1, 0], [], []>} : vector<8x8xf32>, vector<8x8xf32>, vector<8x8xf32> -> vector<8x8xf32>
    %cst_14 = arith.constant dense<0xFF800000> : vector<8xf32>
    %36 = vector.multi_reduction <maximumf>, %35, %cst_14 [1] : vector<8x8xf32> to vector<8xf32>
    %37 = vector.shape_cast %36 : vector<8xf32> to vector<8x1xf32>
    %38 = vector.broadcast %37 : vector<8x1xf32> to vector<8x8xf32>
    %39 = arith.subf %35, %38 : vector<8x8xf32>
    %40 = math.exp %39 : vector<8x8xf32>
    %cst_15 = arith.constant dense<0.000000e+00> : vector<8xf32>
    %41 = vector.multi_reduction <add>, %40, %cst_15 [1] : vector<8x8xf32> to vector<8xf32>
    %42 = vector.shape_cast %41 : vector<8xf32> to vector<8x1xf32>
    %43 = tpu.reciprocal %42 : vector<8x1xf32> -> vector<8x1xf32>
    %cst_16 = arith.constant 0.353553385 : f32
    %44 = vector.broadcast %cst_16 : f32 to vector<8x1xf32>
    %45 = arith.mulf %44, %43 : vector<8x1xf32>
    %46 = vector.broadcast %45 : vector<8x1xf32> to vector<8x8xf32>
    %47 = arith.mulf %40, %46 : vector<8x8xf32>
    %cst_17 = arith.constant dense<0.000000e+00> : vector<8x8xf32>
    %48 = tpu.matmul %47, %34, %cst_17 {dimension_numbers = #tpu.dot_dimension_numbers<[1], [0], [0], [1], [0, 0, 1, 1], [], []>} : vector<8x8xf32>, vector<8x8xf32>, vector<8x8xf32> -> vector<8x8xf32>
    %49 = arith.index_cast %8 : i32 to index
    %c16 = arith.constant 16 : index
    %50 = vector.load %arg7[%49, %c16] : memref<8x96xf32, #tpu.memory_space<vmem>>, vector<8x8xf32>
    %51 = arith.index_cast %8 : i32 to index
    %c48 = arith.constant 48 : index
    %52 = vector.load %arg7[%51, %c48] : memref<8x96xf32, #tpu.memory_space<vmem>>, vector<8x8xf32>
    %53 = arith.index_cast %8 : i32 to index
    %c80 = arith.constant 80 : index
    %54 = vector.load %arg7[%53, %c80] : memref<8x96xf32, #tpu.memory_space<vmem>>, vector<8x8xf32>
    %cst_18 = arith.constant dense<0.000000e+00> : vector<8x8xf32>
    %55 = tpu.matmul %50, %52, %cst_18 {dimension_numbers = #tpu.dot_dimension_numbers<[1], [1], [0], [0], [0, 0, 1, 0], [], []>} : vector<8x8xf32>, vector<8x8xf32>, vector<8x8xf32> -> vector<8x8xf32>
    %cst_19 = arith.constant dense<0xFF800000> : vector<8xf32>
    %56 = vector.multi_reduction <maximumf>, %55, %cst_19 [1] : vector<8x8xf32> to vector<8xf32>
    %57 = vector.shape_cast %56 : vector<8xf32> to vector<8x1xf32>
    %58 = vector.broadcast %57 : vector<8x1xf32> to vector<8x8xf32>
    %59 = arith.subf %55, %58 : vector<8x8xf32>
    %60 = math.exp %59 : vector<8x8xf32>
    %cst_20 = arith.constant dense<0.000000e+00> : vector<8xf32>
    %61 = vector.multi_reduction <add>, %60, %cst_20 [1] : vector<8x8xf32> to vector<8xf32>
    %62 = vector.shape_cast %61 : vector<8xf32> to vector<8x1xf32>
    %63 = tpu.reciprocal %62 : vector<8x1xf32> -> vector<8x1xf32>
    %cst_21 = arith.constant 0.353553385 : f32
    %64 = vector.broadcast %cst_21 : f32 to vector<8x1xf32>
    %65 = arith.mulf %64, %63 : vector<8x1xf32>
    %66 = vector.broadcast %65 : vector<8x1xf32> to vector<8x8xf32>
    %67 = arith.mulf %60, %66 : vector<8x8xf32>
    %cst_22 = arith.constant dense<0.000000e+00> : vector<8x8xf32>
    %68 = tpu.matmul %67, %54, %cst_22 {dimension_numbers = #tpu.dot_dimension_numbers<[1], [0], [0], [1], [0, 0, 1, 1], [], []>} : vector<8x8xf32>, vector<8x8xf32>, vector<8x8xf32> -> vector<8x8xf32>
    %69 = arith.index_cast %8 : i32 to index
    %c24 = arith.constant 24 : index
    %70 = vector.load %arg7[%69, %c24] : memref<8x96xf32, #tpu.memory_space<vmem>>, vector<8x8xf32>
    %71 = arith.index_cast %8 : i32 to index
    %c56 = arith.constant 56 : index
    %72 = vector.load %arg7[%71, %c56] : memref<8x96xf32, #tpu.memory_space<vmem>>, vector<8x8xf32>
    %73 = arith.index_cast %8 : i32 to index
    %c88 = arith.constant 88 : index
    %74 = vector.load %arg7[%73, %c88] : memref<8x96xf32, #tpu.memory_space<vmem>>, vector<8x8xf32>
    %cst_23 = arith.constant dense<0.000000e+00> : vector<8x8xf32>
    %75 = tpu.matmul %70, %72, %cst_23 {dimension_numbers = #tpu.dot_dimension_numbers<[1], [1], [0], [0], [0, 0, 1, 0], [], []>} : vector<8x8xf32>, vector<8x8xf32>, vector<8x8xf32> -> vector<8x8xf32>
    %cst_24 = arith.constant dense<0xFF800000> : vector<8xf32>
    %76 = vector.multi_reduction <maximumf>, %75, %cst_24 [1] : vector<8x8xf32> to vector<8xf32>
    %77 = vector.shape_cast %76 : vector<8xf32> to vector<8x1xf32>
    %78 = vector.broadcast %77 : vector<8x1xf32> to vector<8x8xf32>
    %79 = arith.subf %75, %78 : vector<8x8xf32>
    %80 = math.exp %79 : vector<8x8xf32>
    %cst_25 = arith.constant dense<0.000000e+00> : vector<8xf32>
    %81 = vector.multi_reduction <add>, %80, %cst_25 [1] : vector<8x8xf32> to vector<8xf32>
    %82 = vector.shape_cast %81 : vector<8xf32> to vector<8x1xf32>
    %83 = tpu.reciprocal %82 : vector<8x1xf32> -> vector<8x1xf32>
    %cst_26 = arith.constant 0.353553385 : f32
    %84 = vector.broadcast %cst_26 : f32 to vector<8x1xf32>
    %85 = arith.mulf %84, %83 : vector<8x1xf32>
    %86 = vector.broadcast %85 : vector<8x1xf32> to vector<8x8xf32>
    %87 = arith.mulf %80, %86 : vector<8x8xf32>
    %cst_27 = arith.constant dense<0.000000e+00> : vector<8x8xf32>
    %88 = tpu.matmul %87, %74, %cst_27 {dimension_numbers = #tpu.dot_dimension_numbers<[1], [0], [0], [1], [0, 0, 1, 1], [], []>} : vector<8x8xf32>, vector<8x8xf32>, vector<8x8xf32> -> vector<8x8xf32>
    %89 = tpu.concatenate %28, %48, %68, %88 in 1 : vector<8x8xf32>, vector<8x8xf32>, vector<8x8xf32>, vector<8x8xf32> -> vector<8x32xf32>
    %90 = arith.index_cast %8 : i32 to index
    %c0_28 = arith.constant 0 : index
    %91 = vector.load %arg8[%90, %c0_28] : memref<8x32xf32, #tpu.memory_space<vmem>>, vector<8x32xf32>
    tpu.vector_store %arg8[%90, %c0_28], %89 {strides = array<i32>} : memref<8x32xf32, #tpu.memory_space<vmem>>, vector<8x32xf32>,
    %c1_i32 = arith.constant 1 : i32
    %c0_29 = arith.constant 0 : index
    %c0_30 = arith.constant 0 : index
    %92 = vector.load %arg8[%c0_29, %c0_30] : memref<8x32xf32, #tpu.memory_space<vmem>>, vector<8x32xf32>
    %c0_31 = arith.constant 0 : index
    %c0_32 = arith.constant 0 : index
    %93 = vector.load %arg4[%c0_31, %c0_32] : memref<32x32xf32, #tpu.memory_space<vmem>>, vector<32x32xf32>
    %cst_33 = arith.constant dense<0.000000e+00> : vector<8x32xf32>
    %94 = tpu.matmul %92, %93, %cst_33 {dimension_numbers = #tpu.dot_dimension_numbers<[1], [0], [0], [1], [0, 0, 1, 1], [], []>} : vector<8x32xf32>, vector<32x32xf32>, vector<8x32xf32> -> vector<8x32xf32>
    %c0_34 = arith.constant 0 : index
    %c0_35 = arith.constant 0 : index
    %95 = vector.load %arg5[%c0_34, %c0_35] : memref<1x32xf32, #tpu.memory_space<vmem>>, vector<1x32xf32>
    %96 = vector.broadcast %95 : vector<1x32xf32> to vector<8x32xf32>
    %97 = arith.addf %94, %96 : vector<8x32xf32>
    %c0_36 = arith.constant 0 : index
    %c0_37 = arith.constant 0 : index
    %98 = vector.load %arg6[%c0_36, %c0_37] : memref<8x32xf32, #tpu.memory_space<vmem>>, vector<8x32xf32>
    tpu.vector_store %arg6[%c0_36, %c0_37], %97 {strides = array<i32>} : memref<8x32xf32, #tpu.memory_space<vmem>>, vector<8x32xf32>,
    return
  }
  func.func @transform_0(%arg0: i32) -> (i32, i32) {
    %c0_i32 = arith.constant 0 : i32
    %c0_i32_0 = arith.constant 0 : i32
    return %arg0, %c0_i32 : i32, i32
  }
  func.func @transform_1(%arg0: i32) -> (i32, i32) {
    %c0_i32 = arith.constant 0 : i32
    %c0_i32_0 = arith.constant 0 : i32
    %c0_i32_1 = arith.constant 0 : i32
    return %c0_i32, %c0_i32_0 : i32, i32
  }
  func.func @transform_2(%arg0: i32) -> (i32, i32) {
    %c0_i32 = arith.constant 0 : i32
    %c0_i32_0 = arith.constant 0 : i32
    %c0_i32_1 = arith.constant 0 : i32
    return %c0_i32, %c0_i32_0 : i32, i32
  }
  func.func @transform_3(%arg0: i32) -> (i32, i32) {
    %c0_i32 = arith.constant 0 : i32
    %c0_i32_0 = arith.constant 0 : i32
    %c0_i32_1 = arith.constant 0 : i32
    return %c0_i32, %c0_i32_0 : i32, i32
  }
  func.func @transform_4(%arg0: i32) -> (i32, i32) {
    %c0_i32 = arith.constant 0 : i32
    %c0_i32_0 = arith.constant 0 : i32
    %c0_i32_1 = arith.constant 0 : i32
    return %c0_i32, %c0_i32_0 : i32, i32
  }
  func.func @transform_5(%arg0: i32) -> (i32, i32) {
    %c0_i32 = arith.constant 0 : i32
    %c0_i32_0 = arith.constant 0 : i32
    return %arg0, %c0_i32 : i32, i32
  }
}

</mosaic_0001>

<llo_original>
// kernel: tpu_custom_call.1
$region0: #{tpu_custom_call.1}
  #allocation0 [shape = 'u32[]', space=smem, size = 0x4, offset = 0x4, fixed_abs, tag = 'smem constant byte address 0x4 - core index']
  #allocation1 [shape = 'u32[144,128]{1,0:T(1,128)}', space=vmem, size = 0x12000, scoped, tag = 'internal scratch']
  #allocation2 [shape = 'f32[8,96]{1,0:T(8,128)}', space=vmem, size = 0x1000, scoped, tag = 'scratch operand']
  #allocation3 [shape = 'f32[8,32]{1,0:T(8,128)}', space=vmem, size = 0x1000, scoped, tag = 'scratch operand']
  %s0 = inlined_call_operand.hbm [shape: f32[16,32], index: 0, kind: input, shape index: {}]
  %s1 = inlined_call_operand.hbm [shape: f32[32,96], index: 1, kind: input, shape index: {}]
  %s2 = inlined_call_operand.vmem [shape: f32[1,96], index: 2, kind: input, shape index: {}]
  %s3 = inlined_call_operand.hbm [shape: f32[32,32], index: 3, kind: input, shape index: {}]
  %s4 = inlined_call_operand.vmem [shape: f32[1,32], index: 4, kind: input, shape index: {}]
  %s5 = inlined_call_operand.hbm [shape: f32[16,32], index: 5, kind: output, shape index: {}]
  %s6 = sld [smem:[#allocation0]]
  $region65: #{tpu_custom_call.1} parent=0
    _
  %s8 = ssub.s32 1, %s6
  %s9 = scalar_select 0, %s8, %s6
  $region1: #{tpu_custom_call.1} parent=0
    #allocation4 [shape = 'u8[8192]{0}', space=vmem, size = 0x2000, scoped, tag = 'input window, operand 0']
    #allocation5 [shape = 's32[2]{0}', space=sflag, size = 0x8, scoped, tag = 'scoped memory for tpu_custom_call.1']
    #allocation6 [shape = 's32[2]{0}', space=sflag, size = 0x8, scoped, tag = 'scoped memory for tpu_custom_call.1']
    #allocation7 [shape = 'u8[16384]{0}', space=vmem, size = 0x4000, scoped, tag = 'input window, operand 1, single buffered']
    #allocation8 [shape = 's32[1]{0}', space=sflag, size = 0x4, scoped, tag = 'scoped memory for tpu_custom_call.1']
    #allocation9 [shape = 'u8[16384]{0}', space=vmem, size = 0x4000, scoped, tag = 'input window, operand 3, single buffered']
    #allocation10 [shape = 'u8[8192]{0}', space=vmem, size = 0x2000, scoped, tag = 'output window, operand 0']
    %10 = vsyncpa [#allocation5], 0
    %s11 = scalar_lea.sflag [#allocation5], 1
    %12 = vsyncpa %s11, 0
    %13 = vsyncpa [#allocation8], 0
    %14 = vsyncpa [#allocation6], 0
    %s15 = scalar_lea.sflag [#allocation6], 1
    %16 = vsyncpa %s15, 0
    loop: start=0, step=1, limit=4
    $region2: #{tpu_custom_call.1} parent=1 // loop_pre_header
      _
    $region3: #{tpu_custom_call.1} parent=1 // loop_header
      %s18 = sphi 0, %s22
      %p19 = scmp.ge.s32.totalorder %s18, 4
      %s28 = sphi 0, %s30
      %s31 = sphi 0, %s28
      %s32 = sphi 0, %s31
      %s48 = sphi 0, %s32
      %s52 = sphi 0, %s52
      %s54 = sphi 0, %s52
      %s55 = sphi 0, %s54
      %s69 = sphi 0, %s55
      %s73 = sphi 0, %s73
      %s75 = sphi 0, %s73
      %s76 = sphi 0, %s75
      %s90 = sphi 0, %s76
      %s94 = sphi 0, %s94
      %s96 = sphi 0, %s94
      %s97 = sphi 0, %s96
      %s111 = sphi 0, %s97
      %s115 = sphi 0, %s115
      %s117 = sphi 0, %s115
      %s118 = sphi 0, %s117
      %s132 = sphi 0, %s118
      %s138 = sphi 0, %s140
      %s141 = sphi 0, %s138
      %s142 = sphi 0, %s141
      %s158 = sphi 0, %s142
    $region4: #{tpu_custom_call.1} parent=1 // loop_header_branch
      %21 = sbr.rel (%p19) target = $region8
    $region5: #{tpu_custom_call.1} parent=1 // loop_body
      %s23 = ssub.s32 %s18, 1
      %s24 = ssub.s32 %s18, 2
      %s25 = sadd.s32 %s18, 1
      %s26 = ssub.s32 %s18, %s25
      %p27 = scmp.eq.s32.totalorder %s26, 0
      %s29 = sadd.s32 %s28, 1
      %s30 = scalar_select %p27, %s28, %s29
      %p33 = pneg %p27
      %p34 = scmp.eq.s32.totalorder %s18, 1
      %p35 = por %p33, %p34
      %p36 = scmp.ne.s32.totalorder %s28, %s31
      %p37 = scmp.eq.s32.totalorder %s18, 0
      %p38 = por %p36, %p37
      %p39 = scmp.ne.s32.totalorder %s28, %s31
      %p40 = scmp.eq.s32.totalorder %s23, 1
      %p41 = por %p39, %p40
      %p42 = scmp.ne.s32.totalorder %s31, %s32
      %p43 = scmp.eq.s32.totalorder %s23, 0
      %p44 = por %p42, %p43
      %p45 = scmp.ne.s32.totalorder %s31, %s32
      %p46 = scmp.eq.s32.totalorder %s24, 1
      %p47 = por %p45, %p46
      %p49 = scmp.ne.s32.totalorder %s32, %s48
      %p50 = scmp.eq.s32.totalorder %s24, 0
      %p51 = por %p49, %p50
      %s53 = sadd.s32 %s52, 1
      %p56 = scmp.eq.s32.totalorder %s18, 1
      %p57 = scmp.ne.s32.totalorder %s52, %s54
      %p58 = scmp.eq.s32.totalorder %s18, 0
      %p59 = por %p57, %p58
      %p60 = scmp.ne.s32.totalorder %s52, %s54
      %p61 = scmp.eq.s32.totalorder %s23, 1
      %p62 = por %p60, %p61
      %p63 = scmp.ne.s32.totalorder %s54, %s55
      %p64 = scmp.eq.s32.totalorder %s23, 0
      %p65 = por %p63, %p64
      %p66 = scmp.ne.s32.totalorder %s54, %s55
      %p67 = scmp.eq.s32.totalorder %s24, 1
      %p68 = por %p66, %p67
      %p70 = scmp.ne.s32.totalorder %s55, %s69
      %p71 = scmp.eq.s32.totalorder %s24, 0
      %p72 = por %p70, %p71
      %s74 = sadd.s32 %s73, 1
      %p77 = scmp.eq.s32.totalorder %s18, 1
      %p78 = scmp.ne.s32.totalorder %s73, %s75
      %p79 = scmp.eq.s32.totalorder %s18, 0
      %p80 = por %p78, %p79
      %p81 = scmp.ne.s32.totalorder %s73, %s75
      %p82 = scmp.eq.s32.totalorder %s23, 1
      %p83 = por %p81, %p82
      %p84 = scmp.ne.s32.totalorder %s75, %s76
      %p85 = scmp.eq.s32.totalorder %s23, 0
      %p86 = por %p84, %p85
      %p87 = scmp.ne.s32.totalorder %s75, %s76
      %p88 = scmp.eq.s32.totalorder %s24, 1
      %p89 = por %p87, %p88
      %p91 = scmp.ne.s32.totalorder %s76, %s90
      %p92 = scmp.eq.s32.totalorder %s24, 0
      %p93 = por %p91, %p92
      %s95 = sadd.s32 %s94, 1
      %p98 = scmp.eq.s32.totalorder %s18, 1
      %p99 = scmp.ne.s32.totalorder %s94, %s96
      %p100 = scmp.eq.s32.totalorder %s18, 0
      %p101 = por %p99, %p100
      %p102 = scmp.ne.s32.totalorder %s94, %s96
      %p103 = scmp.eq.s32.totalorder %s23, 1
      %p104 = por %p102, %p103
      %p105 = scmp.ne.s32.totalorder %s96, %s97
      %p106 = scmp.eq.s32.totalorder %s23, 0
      %p107 = por %p105, %p106
      %p108 = scmp.ne.s32.totalorder %s96, %s97
      %p109 = scmp.eq.s32.totalorder %s24, 1
      %p110 = por %p108, %p109
      %p112 = scmp.ne.s32.totalorder %s97, %s111
      %p113 = scmp.eq.s32.totalorder %s24, 0
      %p114 = por %p112, %p113
      %s116 = sadd.s32 %s115, 1
      %p119 = scmp.eq.s32.totalorder %s18, 1
      %p120 = scmp.ne.s32.totalorder %s115, %s117
      %p121 = scmp.eq.s32.totalorder %s18, 0
      %p122 = por %p120, %p121
      %p123 = scmp.ne.s32.totalorder %s115, %s117
      %p124 = scmp.eq.s32.totalorder %s23, 1
      %p125 = por %p123, %p124
      %p126 = scmp.ne.s32.totalorder %s117, %s118
      %p127 = scmp.eq.s32.totalorder %s23, 0
      %p128 = por %p126, %p127
      %p129 = scmp.ne.s32.totalorder %s117, %s118
      %p130 = scmp.eq.s32.totalorder %s24, 1
      %p131 = por %p129, %p130
      %p133 = scmp.ne.s32.totalorder %s118, %s132
      %p134 = scmp.eq.s32.totalorder %s24, 0
      %p135 = por %p133, %p134
      %s136 = ssub.s32 %s18, %s25
      %p137 = scmp.eq.s32.totalorder %s136, 0
      %s139 = sadd.s32 %s138, 1
      %s140 = scalar_select %p137, %s138, %s139
      %p143 = pneg %p137
      %p144 = scmp.eq.s32.totalorder %s18, 1
      %p145 = por %p143, %p144
      %p146 = scmp.ne.s32.totalorder %s138, %s141
      %p147 = scmp.eq.s32.totalorder %s18, 0
      %p148 = por %p146, %p147
      %p149 = scmp.ne.s32.totalorder %s138, %s141
      %p150 = scmp.eq.s32.totalorder %s23, 1
      %p151 = por %p149, %p150
      %p152 = scmp.ne.s32.totalorder %s141, %s142
      %p153 = scmp.eq.s32.totalorder %s23, 0
      %p154 = por %p152, %p153
      %p155 = scmp.ne.s32.totalorder %s141, %s142
      %p156 = scmp.eq.s32.totalorder %s24, 1
      %p157 = por %p155, %p156
      %p159 = scmp.ne.s32.totalorder %s142, %s158
      %p160 = scmp.eq.s32.totalorder %s24, 0
      %p161 = por %p159, %p160
      %p162 = scmp.le.s32.totalorder 1, %s18
      %p163 = scmp.lt.s32.totalorder %s18, 3
      %p164 = pnand %p162, %p163
      %p165 = pneg %p164
      // Predicated region
      $region9: #{tpu_custom_call.1} parent=5 // pred_check
        _
      $region10: #{tpu_custom_call.1} parent=5 // pred_check_branch
        %167 = sbr.rel (%p164) target = $region12
      $region11: #{tpu_custom_call.1} parent=5 // pred_region
        %s168 = ssub.s32 %s18, 1
        // Predicated region
        $region13: #{tpu_custom_call.1} parent=11 // pred_check
          %p169 = pneg %p65
        $region14: #{tpu_custom_call.1} parent=11 // pred_check_branch
          %171 = sbr.rel (%p169) target = $region16
        $region15: #{tpu_custom_call.1} parent=11 // pred_region
          %s173 = ssub.s32 512, 512
          %174 = vsyncadd [#allocation8], %s173
          %s175 = sshll.u32 [#allocation7], 4
          %s176 = int_to_ptr.vmem [resolvable:$true] %s175
          %181 = dma.hbm_to_vmem [thread:$0]  %s1, 512, %s176, [#allocation8], 128, 128, 8
        $region16: #{tpu_custom_call.1} parent=11 // pred_fallthru
          _
        // Predicated region
        $region17: #{tpu_custom_call.1} parent=11 // pred_check
          %p182 = pneg %p86
        $region18: #{tpu_custom_call.1} parent=11 // pred_check_branch
          %184 = sbr.rel (%p182) target = $region20
        $region19: #{tpu_custom_call.1} parent=11 // pred_region
          _
        $region20: #{tpu_custom_call.1} parent=11 // pred_fallthru
          _
        // Predicated region
        $region21: #{tpu_custom_call.1} parent=11 // pred_check
          %p185 = pneg %p107
        $region22: #{tpu_custom_call.1} parent=11 // pred_check_branch
          %187 = sbr.rel (%p185) target = $region24
        $region23: #{tpu_custom_call.1} parent=11 // pred_region
          %s189 = ssub.s32 512, 512
          %190 = vsyncadd [#allocation8], %s189
          %s191 = sshll.u32 [#allocation9], 4
          %s192 = int_to_ptr.vmem [resolvable:$true] %s191
          %197 = dma.hbm_to_vmem [thread:$0]  %s3, 512, %s192, [#allocation8], 128, 128, 8
        $region24: #{tpu_custom_call.1} parent=11 // pred_fallthru
          _
        // Predicated region
        $region25: #{tpu_custom_call.1} parent=11 // pred_check
          %p198 = pneg %p128
        $region26: #{tpu_custom_call.1} parent=11 // pred_check_branch
          %200 = sbr.rel (%p198) target = $region28
        $region27: #{tpu_custom_call.1} parent=11 // pred_region
          _
        $region28: #{tpu_custom_call.1} parent=11 // pred_fallthru
          _
      $region12: #{tpu_custom_call.1} parent=5 // pred_fallthru
        _
      %p201 = scmp.lt.s32.totalorder %s18, 2
      // Predicated region
      $region29: #{tpu_custom_call.1} parent=5 // pred_check
        %p202 = pneg %p201
      $region30: #{tpu_custom_call.1} parent=5 // pred_check_branch
        %204 = sbr.rel (%p202) target = $region32
      $region31: #{tpu_custom_call.1} parent=5 // pred_region
        // Predicated region
        $region33: #{tpu_custom_call.1} parent=31 // pred_check
          %p205 = pneg %p38
        $region34: #{tpu_custom_call.1} parent=31 // pred_check_branch
          %207 = sbr.rel (%p205) target = $region36
        $region35: #{tpu_custom_call.1} parent=31 // pred_region
          %s208 = sand.u32 %s28, 1
          %s209 = scalar_lea.sflag [#allocation5], %s208
          %s210 = sand.u32 %s28, 1
          %s211 = smul.addr %s210, 8
          %s212 = scalar_lea.vmem [#allocation4], %s211
          %s214 = ssub.s32 128, 128
          %215 = vsyncadd %s209, %s214
          %s216 = smul.addr %s18, 128
          %s217 = scalar_lea.hbm %s0, %s216
          %s219 = sshll.u32 %s212, 4
          %s220 = int_to_ptr.vmem [resolvable:$true] %s219
          %222 = dma.hbm_to_vmem [thread:$0]  %s217, 128, %s220, %s209
        $region36: #{tpu_custom_call.1} parent=31 // pred_fallthru
          _
      $region32: #{tpu_custom_call.1} parent=5 // pred_fallthru
        _
      %p223 = scmp.le.s32.totalorder 1, %s18
      %p224 = scmp.lt.s32.totalorder %s18, 3
      %p225 = pnand %p223, %p224
      %p226 = pneg %p225
      // Predicated region
      $region37: #{tpu_custom_call.1} parent=5 // pred_check
        _
      $region38: #{tpu_custom_call.1} parent=5 // pred_check_branch
        %228 = sbr.rel (%p225) target = $region40
      $region39: #{tpu_custom_call.1} parent=5 // pred_region
        %s229 = ssub.s32 %s18, 1
        %s230 = sand.u32 %s31, 1
        %s231 = scalar_lea.sflag [#allocation5], %s230
        %s232 = sand.u32 %s31, 1
        %s233 = smul.addr %s232, 8
        %s234 = scalar_lea.vmem [#allocation4], %s233
        // Predicated region
        $region41: #{tpu_custom_call.1} parent=39 // pred_check
          %p235 = pneg %p44
        $region42: #{tpu_custom_call.1} parent=39 // pred_check_branch
          %237 = sbr.rel (%p235) target = $region44
        $region43: #{tpu_custom_call.1} parent=39 // pred_region
          %238 = dma.done %s231, 128
        $region44: #{tpu_custom_call.1} parent=39 // pred_fallthru
          _
        // Predicated region
        $region45: #{tpu_custom_call.1} parent=39 // pred_check
          %p239 = pneg %p65
        $region46: #{tpu_custom_call.1} parent=39 // pred_check_branch
          %241 = sbr.rel (%p239) target = $region48
        $region47: #{tpu_custom_call.1} parent=39 // pred_region
          %242 = dma.done [#allocation8], 512
        $region48: #{tpu_custom_call.1} parent=39 // pred_fallthru
          _
        // Predicated region
        $region49: #{tpu_custom_call.1} parent=39 // pred_check
          %p243 = pneg %p107
        $region50: #{tpu_custom_call.1} parent=39 // pred_check_branch
          %245 = sbr.rel (%p243) target = $region52
        $region51: #{tpu_custom_call.1} parent=39 // pred_region
          %246 = dma.done [#allocation8], 512
        $region52: #{tpu_custom_call.1} parent=39 // pred_fallthru
          _
        %s247 = sand.u32 %s31, 1
        %s248 = scalar_lea.sflag [#allocation5], %s247
        %s249 = sand.u32 %s31, 1
        %s250 = smul.addr %s249, 8
        %s251 = scalar_lea.vmem [#allocation4], %s250
        %p252 = pneg %p44
        %p253 = pneg %p41
        %p254 = pneg %p65
        %p255 = pneg %p62
        %p256 = pneg %p86
        %p257 = pneg %p83
        %p258 = pneg %p107
        %p259 = pneg %p104
        %p260 = pneg %p128
        %p261 = pneg %p125
        %p262 = pneg %p154
        %p263 = pneg %p151
        %s264 = sand.u32 %s141, 1
        %s265 = scalar_lea.sflag [#allocation6], %s264
        %s266 = sand.u32 %s141, 1
        %s267 = smul.addr %s266, 8
        %s268 = scalar_lea.vmem [#allocation10], %s267
        %v269 = vld [vmem:[%s234] sm:$0xff]
        %v270 = vld [vmem:[#allocation7] sm:$0xff]
        %v271 = vld [vmem:[#allocation7 + $0x8] sm:$0xff]
        %v272 = vld [vmem:[#allocation7 + $0x10] sm:$0xff]
        %v273 = vld [vmem:[#allocation7 + $0x18] sm:$0xff]
        %v274 = vld [vmem:[%s2] sm:$0x1]
        %v276 = vlaneseq
        %v277 = vshrl.u32 %v276, 7
        %v278 = vsub.s32 0, %v277
        %v279 = vrot.slane %v274, %v278
        %vm281 = vcmask 261120
        %v283 = vsel %vm281, %v269, 0
        %285 = vmatprep.subr.mxu0 0.0
        %286 = vmatpush1.msra.mxu0 0.0
        %287 = vmatprep.subr.mxu0 0.0
        %288 = vmatpush1.msra.mxu0 0.0
        %289 = vmatprep.subr.mxu0 0.0
        %290 = vmatpush1.msra.mxu0 0.0
        %291 = vmatprep.subr.mxu0 0.0
        %292 = vmatpush1.msra.mxu0 0.0
        %293 = vmatprep.subr.mxu0 0.0
        %294 = vmatpush1.msra.mxu0 0.0
        %295 = vmatprep.subr.mxu0 0.0
        %296 = vmatpush1.msra.mxu0 0.0
        %297 = vmatprep.subr.mxu0 0.0
        %298 = vmatpush1.msra.mxu0 0.0
        %299 = vmatprep.subr.mxu0 0.0
        %300 = vmatpush1.msra.mxu0 0.0
        %301 = vmatprep.subr.mxu0 0.0
        %302 = vmatpush1.msra.mxu0 0.0
        %303 = vmatprep.subr.mxu0 0.0
        %304 = vmatpush1.msra.mxu0 0.0
        %305 = vmatprep.subr.mxu0 0.0
        %306 = vmatpush1.msra.mxu0 0.0
        %307 = vmatprep.subr.mxu0 0.0
        %308 = vmatpush1.msra.mxu0 0.0
        %309 = vmatprep.subr.mxu0 0.0
        %310 = vmatpush1.msra.mxu0 %v273
        %311 = vmatprep.subr.mxu0 0.0
        %312 = vmatpush1.msra.mxu0 %v272
        %313 = vmatprep.subr.mxu0 0.0
        %314 = vmatpush1.msra.mxu0 %v271
        %315 = vmatprep.subr.mxu0 0.0
        %316 = vmatpush1.msra.mxu0 %v270
        %317 = vmatprep.subr.mxu0 0.0
        %318 = vmatpush2.msra.mxu0 0.0
        %319 = vmatprep.subr.mxu0 0.0
        %320 = vmatpush2.msra.mxu0 0.0
        %321 = vmatprep.subr.mxu0 0.0
        %322 = vmatpush2.msra.mxu0 0.0
        %323 = vmatprep.subr.mxu0 0.0
        %324 = vmatpush2.msra.mxu0 0.0
        %325 = vmatprep.subr.mxu0 0.0
        %326 = vmatpush2.msra.mxu0 0.0
        %327 = vmatprep.subr.mxu0 0.0
        %328 = vmatpush2.msra.mxu0 0.0
        %329 = vmatprep.subr.mxu0 0.0
        %330 = vmatpush2.msra.mxu0 0.0
        %331 = vmatprep.subr.mxu0 0.0
        %332 = vmatpush2.msra.mxu0 0.0
        %333 = vmatprep.subr.mxu0 0.0
        %334 = vmatpush2.msra.mxu0 0.0
        %335 = vmatprep.subr.mxu0 0.0
        %336 = vmatpush2.msra.mxu0 0.0
        %337 = vmatprep.subr.mxu0 0.0
        %338 = vmatpush2.msra.mxu0 0.0
        %339 = vmatprep.subr.mxu0 0.0
        %340 = vmatpush2.msra.mxu0 0.0
        %341 = vmatprep.subr.mxu0 0.0
        %342 = vmatpush2.msra.mxu0 0.0
        %343 = vmatprep.subr.mxu0 0.0
        %344 = vmatpush2.msra.mxu0 0.0
        %345 = vmatprep.subr.mxu0 0.0
        %346 = vmatpush2.msra.mxu0 0.0
        %347 = vmatprep.subr.mxu0 0.0
        %348 = vmatpush2.msra.mxu0 0.0
        %349 = vmatprep.mubr.f32.mxu0 0.0
        %350 = vmatmul.mubr.f32.gmra.mxu0 %v283
        %v351 = vpop.f32.mrf.mxu0
        %v352 = vadd.f32 %v279, %v351
        %v353 = vpop.f32.mrf.mxu0
        %354 = vdwg.mxu0
        %vm355 = vcmask 785408
        %356 = vst.msk [vmem:[#allocation2] sm:$0xff] %vm355, %v352
        %v357 = vld [vmem:[#allocation2] sm:$0xff]
        %359 = vrot.lane.b32.xlu0 %v357, 96
        %v360 = vpop.permute.xlu0 %359
        %vm361 = vcmask 64512
        %v362 = vsel %vm361, %v357, 0
        %v364 = vsel %vm361, %v360, 0
        %366 = vmatprep.subr.mxu0 0.0
        %367 = vmatpush1.xpose.msra.mxu0 0.0
        %368 = vmatprep.subr.mxu0 0.0
        %369 = vmatpush1.xpose.msra.mxu0 0.0
        %370 = vmatprep.subr.mxu0 0.0
        %371 = vmatpush1.xpose.msra.mxu0 0.0
        %372 = vmatprep.subr.mxu0 0.0
        %373 = vmatpush1.xpose.msra.mxu0 0.0
        %374 = vmatprep.subr.mxu0 0.0
        %375 = vmatpush1.xpose.msra.mxu0 0.0
        %376 = vmatprep.subr.mxu0 0.0
        %377 = vmatpush1.xpose.msra.mxu0 0.0
        %378 = vmatprep.subr.mxu0 0.0
        %379 = vmatpush1.xpose.msra.mxu0 0.0
        %380 = vmatprep.subr.mxu0 0.0
        %381 = vmatpush1.xpose.msra.mxu0 0.0
        %382 = vmatprep.subr.mxu0 0.0
        %383 = vmatpush1.xpose.msra.mxu0 0.0
        %384 = vmatprep.subr.mxu0 0.0
        %385 = vmatpush1.xpose.msra.mxu0 0.0
        %386 = vmatprep.subr.mxu0 0.0
        %387 = vmatpush1.xpose.msra.mxu0 0.0
        %388 = vmatprep.subr.mxu0 0.0
        %389 = vmatpush1.xpose.msra.mxu0 0.0
        %390 = vmatprep.subr.mxu0 0.0
        %391 = vmatpush1.xpose.msra.mxu0 0.0
        %392 = vmatprep.subr.mxu0 0.0
        %393 = vmatpush1.xpose.msra.mxu0 0.0
        %394 = vmatprep.subr.mxu0 0.0
        %395 = vmatpush1.xpose.msra.mxu0 0.0
        %396 = vmatprep.subr.mxu0 0.0
        %397 = vmatpush1.xpose.msra.mxu0 %v364
        %398 = vmatprep.subr.mxu0 0.0
        %399 = vmatpush2.xpose.msra.mxu0 0.0
        %400 = vmatprep.subr.mxu0 0.0
        %401 = vmatpush2.xpose.msra.mxu0 0.0
        %402 = vmatprep.subr.mxu0 0.0
        %403 = vmatpush2.xpose.msra.mxu0 0.0
        %404 = vmatprep.subr.mxu0 0.0
        %405 = vmatpush2.xpose.msra.mxu0 0.0
        %406 = vmatprep.subr.mxu0 0.0
        %407 = vmatpush2.xpose.msra.mxu0 0.0
        %408 = vmatprep.subr.mxu0 0.0
        %409 = vmatpush2.xpose.msra.mxu0 0.0
        %410 = vmatprep.subr.mxu0 0.0
        %411 = vmatpush2.xpose.msra.mxu0 0.0
        %412 = vmatprep.subr.mxu0 0.0
        %413 = vmatpush2.xpose.msra.mxu0 0.0
        %414 = vmatprep.subr.mxu0 0.0
        %415 = vmatpush2.xpose.msra.mxu0 0.0
        %416 = vmatprep.subr.mxu0 0.0
        %417 = vmatpush2.xpose.msra.mxu0 0.0
        %418 = vmatprep.subr.mxu0 0.0
        %419 = vmatpush2.xpose.msra.mxu0 0.0
        %420 = vmatprep.subr.mxu0 0.0
        %421 = vmatpush2.xpose.msra.mxu0 0.0
        %422 = vmatprep.subr.mxu0 0.0
        %423 = vmatpush2.xpose.msra.mxu0 0.0
        %424 = vmatprep.subr.mxu0 0.0
        %425 = vmatpush2.xpose.msra.mxu0 0.0
        %426 = vmatprep.subr.mxu0 0.0
        %427 = vmatpush2.xpose.msra.mxu0 0.0
        %428 = vmatprep.subr.mxu0 0.0
        %429 = vmatpush2.xpose.msra.mxu0 0.0
        %430 = vmatprep.mubr.f32.mxu0 0.0
        %431 = vmatmul.mubr.f32.gmra.mxu0 %v362
        %v432 = vpop.f32.mrf.mxu0
        %v433 = vadd.f32 0.0, %v432
        %v434 = vpop.f32.mrf.mxu0
        %435 = vdwg.mxu0
        %v436 = vsel %vm361, %v433, -inf
        %437 = vmax.xlane.f32.xlu0 %v436
        %v438 = vpop.xlane.xlu0 %437
        %v439 = vsub.f32 %v433, %v438
        %v440 = vmul.f32 %v439, 1.442695
        %v441 = vpow.pop %v440
        %v442 = vsel %vm361, %v441, 0.0
        %443 = vadd.xlane.f32.xlu0 %v442
        %v444 = vpop.xlane.xlu0 %443
        %v445 = vrcp.pop %v444
        %v446 = vmul.f32 %v445, 0.35355338
        %v447 = vmul.f32 %v441, %v446
        %448 = vrot.lane.b32.xlu0 %v357, 64
        %v449 = vpop.permute.xlu0 %448
        %v452 = vsel %vm361, %v447, 0
        %454 = vmatprep.subr.mxu0 0.0
        %455 = vmatpush1.msra.mxu0 0.0
        %456 = vmatprep.subr.mxu0 0.0
        %457 = vmatpush1.msra.mxu0 0.0
        %458 = vmatprep.subr.mxu0 0.0
        %459 = vmatpush1.msra.mxu0 0.0
        %460 = vmatprep.subr.mxu0 0.0
        %461 = vmatpush1.msra.mxu0 0.0
        %462 = vmatprep.subr.mxu0 0.0
        %463 = vmatpush1.msra.mxu0 0.0
        %464 = vmatprep.subr.mxu0 0.0
        %465 = vmatpush1.msra.mxu0 0.0
        %466 = vmatprep.subr.mxu0 0.0
        %467 = vmatpush1.msra.mxu0 0.0
        %468 = vmatprep.subr.mxu0 0.0
        %469 = vmatpush1.msra.mxu0 0.0
        %470 = vmatprep.subr.mxu0 0.0
        %471 = vmatpush1.msra.mxu0 0.0
        %472 = vmatprep.subr.mxu0 0.0
        %473 = vmatpush1.msra.mxu0 0.0
        %474 = vmatprep.subr.mxu0 0.0
        %475 = vmatpush1.msra.mxu0 0.0
        %476 = vmatprep.subr.mxu0 0.0
        %477 = vmatpush1.msra.mxu0 0.0
        %478 = vmatprep.subr.mxu0 0.0
        %479 = vmatpush1.msra.mxu0 0.0
        %480 = vmatprep.subr.mxu0 0.0
        %481 = vmatpush1.msra.mxu0 0.0
        %482 = vmatprep.subr.mxu0 0.0
        %483 = vmatpush1.msra.mxu0 0.0
        %484 = vmatprep.subr.mxu0 0.0
        %485 = vmatpush1.msra.mxu0 %v449
        %486 = vmatprep.subr.mxu0 0.0
        %487 = vmatpush2.msra.mxu0 0.0
        %488 = vmatprep.subr.mxu0 0.0
        %489 = vmatpush2.msra.mxu0 0.0
        %490 = vmatprep.subr.mxu0 0.0
        %491 = vmatpush2.msra.mxu0 0.0
        %492 = vmatprep.subr.mxu0 0.0
        %493 = vmatpush2.msra.mxu0 0.0
        %494 = vmatprep.subr.mxu0 0.0
        %495 = vmatpush2.msra.mxu0 0.0
        %496 = vmatprep.subr.mxu0 0.0
        %497 = vmatpush2.msra.mxu0 0.0
        %498 = vmatprep.subr.mxu0 0.0
        %499 = vmatpush2.msra.mxu0 0.0
        %500 = vmatprep.subr.mxu0 0.0
        %501 = vmatpush2.msra.mxu0 0.0
        %502 = vmatprep.subr.mxu0 0.0
        %503 = vmatpush2.msra.mxu0 0.0
        %504 = vmatprep.subr.mxu0 0.0
        %505 = vmatpush2.msra.mxu0 0.0
        %506 = vmatprep.subr.mxu0 0.0
        %507 = vmatpush2.msra.mxu0 0.0
        %508 = vmatprep.subr.mxu0 0.0
        %509 = vmatpush2.msra.mxu0 0.0
        %510 = vmatprep.subr.mxu0 0.0
        %511 = vmatpush2.msra.mxu0 0.0
        %512 = vmatprep.subr.mxu0 0.0
        %513 = vmatpush2.msra.mxu0 0.0
        %514 = vmatprep.subr.mxu0 0.0
        %515 = vmatpush2.msra.mxu0 0.0
        %516 = vmatprep.subr.mxu0 0.0
        %517 = vmatpush2.msra.mxu0 0.0
        %518 = vmatprep.mubr.f32.mxu0 0.0
        %519 = vmatmul.mubr.f32.gmra.mxu0 %v452
        %v520 = vpop.f32.mrf.mxu0
        %v521 = vadd.f32 0.0, %v520
        %v522 = vpop.f32.mrf.mxu0
        %523 = vdwg.mxu0
        %524 = vrot.lane.b32.xlu0 %v357, 120
        %v525 = vpop.permute.xlu0 %524
        %526 = vrot.lane.b32.xlu0 %v357, 88
        %v527 = vpop.permute.xlu0 %526
        %v528 = vsel %vm361, %v525, 0
        %v530 = vsel %vm361, %v527, 0
        %532 = vmatprep.subr.mxu0 0.0
        %533 = vmatpush1.xpose.msra.mxu0 0.0
        %534 = vmatprep.subr.mxu0 0.0
        %535 = vmatpush1.xpose.msra.mxu0 0.0
        %536 = vmatprep.subr.mxu0 0.0
        %537 = vmatpush1.xpose.msra.mxu0 0.0
        %538 = vmatprep.subr.mxu0 0.0
        %539 = vmatpush1.xpose.msra.mxu0 0.0
        %540 = vmatprep.subr.mxu0 0.0
        %541 = vmatpush1.xpose.msra.mxu0 0.0
        %542 = vmatprep.subr.mxu0 0.0
        %543 = vmatpush1.xpose.msra.mxu0 0.0
        %544 = vmatprep.subr.mxu0 0.0
        %545 = vmatpush1.xpose.msra.mxu0 0.0
        %546 = vmatprep.subr.mxu0 0.0
        %547 = vmatpush1.xpose.msra.mxu0 0.0
        %548 = vmatprep.subr.mxu0 0.0
        %549 = vmatpush1.xpose.msra.mxu0 0.0
        %550 = vmatprep.subr.mxu0 0.0
        %551 = vmatpush1.xpose.msra.mxu0 0.0
        %552 = vmatprep.subr.mxu0 0.0
        %553 = vmatpush1.xpose.msra.mxu0 0.0
        %554 = vmatprep.subr.mxu0 0.0
        %555 = vmatpush1.xpose.msra.mxu0 0.0
        %556 = vmatprep.subr.mxu0 0.0
        %557 = vmatpush1.xpose.msra.mxu0 0.0
        %558 = vmatprep.subr.mxu0 0.0
        %559 = vmatpush1.xpose.msra.mxu0 0.0
        %560 = vmatprep.subr.mxu0 0.0
        %561 = vmatpush1.xpose.msra.mxu0 0.0
        %562 = vmatprep.subr.mxu0 0.0
        %563 = vmatpush1.xpose.msra.mxu0 %v530
        %564 = vmatprep.subr.mxu0 0.0
        %565 = vmatpush2.xpose.msra.mxu0 0.0
        %566 = vmatprep.subr.mxu0 0.0
        %567 = vmatpush2.xpose.msra.mxu0 0.0
        %568 = vmatprep.subr.mxu0 0.0
        %569 = vmatpush2.xpose.msra.mxu0 0.0
        %570 = vmatprep.subr.mxu0 0.0
        %571 = vmatpush2.xpose.msra.mxu0 0.0
        %572 = vmatprep.subr.mxu0 0.0
        %573 = vmatpush2.xpose.msra.mxu0 0.0
        %574 = vmatprep.subr.mxu0 0.0
        %575 = vmatpush2.xpose.msra.mxu0 0.0
        %576 = vmatprep.subr.mxu0 0.0
        %577 = vmatpush2.xpose.msra.mxu0 0.0
        %578 = vmatprep.subr.mxu0 0.0
        %579 = vmatpush2.xpose.msra.mxu0 0.0
        %580 = vmatprep.subr.mxu0 0.0
        %581 = vmatpush2.xpose.msra.mxu0 0.0
        %582 = vmatprep.subr.mxu0 0.0
        %583 = vmatpush2.xpose.msra.mxu0 0.0
        %584 = vmatprep.subr.mxu0 0.0
        %585 = vmatpush2.xpose.msra.mxu0 0.0
        %586 = vmatprep.subr.mxu0 0.0
        %587 = vmatpush2.xpose.msra.mxu0 0.0
        %588 = vmatprep.subr.mxu0 0.0
        %589 = vmatpush2.xpose.msra.mxu0 0.0
        %590 = vmatprep.subr.mxu0 0.0
        %591 = vmatpush2.xpose.msra.mxu0 0.0
        %592 = vmatprep.subr.mxu0 0.0
        %593 = vmatpush2.xpose.msra.mxu0 0.0
        %594 = vmatprep.subr.mxu0 0.0
        %595 = vmatpush2.xpose.msra.mxu0 0.0
        %596 = vmatprep.mubr.f32.mxu0 0.0
        %597 = vmatmul.mubr.f32.gmra.mxu0 %v528
        %v598 = vpop.f32.mrf.mxu0
        %v599 = vadd.f32 0.0, %v598
        %v600 = vpop.f32.mrf.mxu0
        %601 = vdwg.mxu0
        %v602 = vsel %vm361, %v599, -inf
        %603 = vmax.xlane.f32.xlu0 %v602
        %v604 = vpop.xlane.xlu0 %603
        %v605 = vsub.f32 %v599, %v604
        %v606 = vmul.f32 %v605, 1.442695
        %v607 = vpow.pop %v606
        %v608 = vsel %vm361, %v607, 0.0
        %609 = vadd.xlane.f32.xlu0 %v608
        %v610 = vpop.xlane.xlu0 %609
        %v611 = vrcp.pop %v610
        %v612 = vmul.f32 %v611, 0.35355338
        %v613 = vmul.f32 %v607, %v612
        %614 = vrot.lane.b32.xlu0 %v357, 56
        %v615 = vpop.permute.xlu0 %614
        %v618 = vsel %vm361, %v613, 0
        %620 = vmatprep.subr.mxu0 0.0
        %621 = vmatpush1.msra.mxu0 0.0
        %622 = vmatprep.subr.mxu0 0.0
        %623 = vmatpush1.msra.mxu0 0.0
        %624 = vmatprep.subr.mxu0 0.0
        %625 = vmatpush1.msra.mxu0 0.0
        %626 = vmatprep.subr.mxu0 0.0
        %627 = vmatpush1.msra.mxu0 0.0
        %628 = vmatprep.subr.mxu0 0.0
        %629 = vmatpush1.msra.mxu0 0.0
        %630 = vmatprep.subr.mxu0 0.0
        %631 = vmatpush1.msra.mxu0 0.0
        %632 = vmatprep.subr.mxu0 0.0
        %633 = vmatpush1.msra.mxu0 0.0
        %634 = vmatprep.subr.mxu0 0.0
        %635 = vmatpush1.msra.mxu0 0.0
        %636 = vmatprep.subr.mxu0 0.0
        %637 = vmatpush1.msra.mxu0 0.0
        %638 = vmatprep.subr.mxu0 0.0
        %639 = vmatpush1.msra.mxu0 0.0
        %640 = vmatprep.subr.mxu0 0.0
        %641 = vmatpush1.msra.mxu0 0.0
        %642 = vmatprep.subr.mxu0 0.0
        %643 = vmatpush1.msra.mxu0 0.0
        %644 = vmatprep.subr.mxu0 0.0
        %645 = vmatpush1.msra.mxu0 0.0
        %646 = vmatprep.subr.mxu0 0.0
        %647 = vmatpush1.msra.mxu0 0.0
        %648 = vmatprep.subr.mxu0 0.0
        %649 = vmatpush1.msra.mxu0 0.0
        %650 = vmatprep.subr.mxu0 0.0
        %651 = vmatpush1.msra.mxu0 %v615
        %652 = vmatprep.subr.mxu0 0.0
        %653 = vmatpush2.msra.mxu0 0.0
        %654 = vmatprep.subr.mxu0 0.0
        %655 = vmatpush2.msra.mxu0 0.0
        %656 = vmatprep.subr.mxu0 0.0
        %657 = vmatpush2.msra.mxu0 0.0
        %658 = vmatprep.subr.mxu0 0.0
        %659 = vmatpush2.msra.mxu0 0.0
        %660 = vmatprep.subr.mxu0 0.0
        %661 = vmatpush2.msra.mxu0 0.0
        %662 = vmatprep.subr.mxu0 0.0
        %663 = vmatpush2.msra.mxu0 0.0
        %664 = vmatprep.subr.mxu0 0.0
        %665 = vmatpush2.msra.mxu0 0.0
        %666 = vmatprep.subr.mxu0 0.0
        %667 = vmatpush2.msra.mxu0 0.0
        %668 = vmatprep.subr.mxu0 0.0
        %669 = vmatpush2.msra.mxu0 0.0
        %670 = vmatprep.subr.mxu0 0.0
        %671 = vmatpush2.msra.mxu0 0.0
        %672 = vmatprep.subr.mxu0 0.0
        %673 = vmatpush2.msra.mxu0 0.0
        %674 = vmatprep.subr.mxu0 0.0
        %675 = vmatpush2.msra.mxu0 0.0
        %676 = vmatprep.subr.mxu0 0.0
        %677 = vmatpush2.msra.mxu0 0.0
        %678 = vmatprep.subr.mxu0 0.0
        %679 = vmatpush2.msra.mxu0 0.0
        %680 = vmatprep.subr.mxu0 0.0
        %681 = vmatpush2.msra.mxu0 0.0
        %682 = vmatprep.subr.mxu0 0.0
        %683 = vmatpush2.msra.mxu0 0.0
        %684 = vmatprep.mubr.f32.mxu0 0.0
        %685 = vmatmul.mubr.f32.gmra.mxu0 %v618
        %v686 = vpop.f32.mrf.mxu0
        %v687 = vadd.f32 0.0, %v686
        %v688 = vpop.f32.mrf.mxu0
        %689 = vdwg.mxu0
        %690 = vrot.lane.b32.xlu0 %v357, 112
        %v691 = vpop.permute.xlu0 %690
        %692 = vrot.lane.b32.xlu0 %v357, 80
        %v693 = vpop.permute.xlu0 %692
        %v694 = vsel %vm361, %v691, 0
        %v696 = vsel %vm361, %v693, 0
        %698 = vmatprep.subr.mxu0 0.0
        %699 = vmatpush1.xpose.msra.mxu0 0.0
        %700 = vmatprep.subr.mxu0 0.0
        %701 = vmatpush1.xpose.msra.mxu0 0.0
        %702 = vmatprep.subr.mxu0 0.0
        %703 = vmatpush1.xpose.msra.mxu0 0.0
        %704 = vmatprep.subr.mxu0 0.0
        %705 = vmatpush1.xpose.msra.mxu0 0.0
        %706 = vmatprep.subr.mxu0 0.0
        %707 = vmatpush1.xpose.msra.mxu0 0.0
        %708 = vmatprep.subr.mxu0 0.0
        %709 = vmatpush1.xpose.msra.mxu0 0.0
        %710 = vmatprep.subr.mxu0 0.0
        %711 = vmatpush1.xpose.msra.mxu0 0.0
        %712 = vmatprep.subr.mxu0 0.0
        %713 = vmatpush1.xpose.msra.mxu0 0.0
        %714 = vmatprep.subr.mxu0 0.0
        %715 = vmatpush1.xpose.msra.mxu0 0.0
        %716 = vmatprep.subr.mxu0 0.0
        %717 = vmatpush1.xpose.msra.mxu0 0.0
        %718 = vmatprep.subr.mxu0 0.0
        %719 = vmatpush1.xpose.msra.mxu0 0.0
        %720 = vmatprep.subr.mxu0 0.0
        %721 = vmatpush1.xpose.msra.mxu0 0.0
        %722 = vmatprep.subr.mxu0 0.0
        %723 = vmatpush1.xpose.msra.mxu0 0.0
        %724 = vmatprep.subr.mxu0 0.0
        %725 = vmatpush1.xpose.msra.mxu0 0.0
        %726 = vmatprep.subr.mxu0 0.0
        %727 = vmatpush1.xpose.msra.mxu0 0.0
        %728 = vmatprep.subr.mxu0 0.0
        %729 = vmatpush1.xpose.msra.mxu0 %v696
        %730 = vmatprep.subr.mxu0 0.0
        %731 = vmatpush2.xpose.msra.mxu0 0.0
        %732 = vmatprep.subr.mxu0 0.0
        %733 = vmatpush2.xpose.msra.mxu0 0.0
        %734 = vmatprep.subr.mxu0 0.0
        %735 = vmatpush2.xpose.msra.mxu0 0.0
        %736 = vmatprep.subr.mxu0 0.0
        %737 = vmatpush2.xpose.msra.mxu0 0.0
        %738 = vmatprep.subr.mxu0 0.0
        %739 = vmatpush2.xpose.msra.mxu0 0.0
        %740 = vmatprep.subr.mxu0 0.0
        %741 = vmatpush2.xpose.msra.mxu0 0.0
        %742 = vmatprep.subr.mxu0 0.0
        %743 = vmatpush2.xpose.msra.mxu0 0.0
        %744 = vmatprep.subr.mxu0 0.0
        %745 = vmatpush2.xpose.msra.mxu0 0.0
        %746 = vmatprep.subr.mxu0 0.0
        %747 = vmatpush2.xpose.msra.mxu0 0.0
        %748 = vmatprep.subr.mxu0 0.0
        %749 = vmatpush2.xpose.msra.mxu0 0.0
        %750 = vmatprep.subr.mxu0 0.0
        %751 = vmatpush2.xpose.msra.mxu0 0.0
        %752 = vmatprep.subr.mxu0 0.0
        %753 = vmatpush2.xpose.msra.mxu0 0.0
        %754 = vmatprep.subr.mxu0 0.0
        %755 = vmatpush2.xpose.msra.mxu0 0.0
        %756 = vmatprep.subr.mxu0 0.0
        %757 = vmatpush2.xpose.msra.mxu0 0.0
        %758 = vmatprep.subr.mxu0 0.0
        %759 = vmatpush2.xpose.msra.mxu0 0.0
        %760 = vmatprep.subr.mxu0 0.0
        %761 = vmatpush2.xpose.msra.mxu0 0.0
        %762 = vmatprep.mubr.f32.mxu0 0.0
        %763 = vmatmul.mubr.f32.gmra.mxu0 %v694
        %v764 = vpop.f32.mrf.mxu0
        %v765 = vadd.f32 0.0, %v764
        %v766 = vpop.f32.mrf.mxu0
        %767 = vdwg.mxu0
        %v768 = vsel %vm361, %v765, -inf
        %769 = vmax.xlane.f32.xlu0 %v768
        %v770 = vpop.xlane.xlu0 %769
        %v771 = vsub.f32 %v765, %v770
        %v772 = vmul.f32 %v771, 1.442695
        %v773 = vpow.pop %v772
        %v774 = vsel %vm361, %v773, 0.0
        %775 = vadd.xlane.f32.xlu0 %v774
        %v776 = vpop.xlane.xlu0 %775
        %v777 = vrcp.pop %v776
        %v778 = vmul.f32 %v777, 0.35355338
        %v779 = vmul.f32 %v773, %v778
        %780 = vrot.lane.b32.xlu0 %v357, 48
        %v781 = vpop.permute.xlu0 %780
        %v784 = vsel %vm361, %v779, 0
        %786 = vmatprep.subr.mxu0 0.0
        %787 = vmatpush1.msra.mxu0 0.0
        %788 = vmatprep.subr.mxu0 0.0
        %789 = vmatpush1.msra.mxu0 0.0
        %790 = vmatprep.subr.mxu0 0.0
        %791 = vmatpush1.msra.mxu0 0.0
        %792 = vmatprep.subr.mxu0 0.0
        %793 = vmatpush1.msra.mxu0 0.0
        %794 = vmatprep.subr.mxu0 0.0
        %795 = vmatpush1.msra.mxu0 0.0
        %796 = vmatprep.subr.mxu0 0.0
        %797 = vmatpush1.msra.mxu0 0.0
        %798 = vmatprep.subr.mxu0 0.0
        %799 = vmatpush1.msra.mxu0 0.0
        %800 = vmatprep.subr.mxu0 0.0
        %801 = vmatpush1.msra.mxu0 0.0
        %802 = vmatprep.subr.mxu0 0.0
        %803 = vmatpush1.msra.mxu0 0.0
        %804 = vmatprep.subr.mxu0 0.0
        %805 = vmatpush1.msra.mxu0 0.0
        %806 = vmatprep.subr.mxu0 0.0
        %807 = vmatpush1.msra.mxu0 0.0
        %808 = vmatprep.subr.mxu0 0.0
        %809 = vmatpush1.msra.mxu0 0.0
        %810 = vmatprep.subr.mxu0 0.0
        %811 = vmatpush1.msra.mxu0 0.0
        %812 = vmatprep.subr.mxu0 0.0
        %813 = vmatpush1.msra.mxu0 0.0
        %814 = vmatprep.subr.mxu0 0.0
        %815 = vmatpush1.msra.mxu0 0.0
        %816 = vmatprep.subr.mxu0 0.0
        %817 = vmatpush1.msra.mxu0 %v781
        %818 = vmatprep.subr.mxu0 0.0
        %819 = vmatpush2.msra.mxu0 0.0
        %820 = vmatprep.subr.mxu0 0.0
        %821 = vmatpush2.msra.mxu0 0.0
        %822 = vmatprep.subr.mxu0 0.0
        %823 = vmatpush2.msra.mxu0 0.0
        %824 = vmatprep.subr.mxu0 0.0
        %825 = vmatpush2.msra.mxu0 0.0
        %826 = vmatprep.subr.mxu0 0.0
        %827 = vmatpush2.msra.mxu0 0.0
        %828 = vmatprep.subr.mxu0 0.0
        %829 = vmatpush2.msra.mxu0 0.0
        %830 = vmatprep.subr.mxu0 0.0
        %831 = vmatpush2.msra.mxu0 0.0
        %832 = vmatprep.subr.mxu0 0.0
        %833 = vmatpush2.msra.mxu0 0.0
        %834 = vmatprep.subr.mxu0 0.0
        %835 = vmatpush2.msra.mxu0 0.0
        %836 = vmatprep.subr.mxu0 0.0
        %837 = vmatpush2.msra.mxu0 0.0
        %838 = vmatprep.subr.mxu0 0.0
        %839 = vmatpush2.msra.mxu0 0.0
        %840 = vmatprep.subr.mxu0 0.0
        %841 = vmatpush2.msra.mxu0 0.0
        %842 = vmatprep.subr.mxu0 0.0
        %843 = vmatpush2.msra.mxu0 0.0
        %844 = vmatprep.subr.mxu0 0.0
        %845 = vmatpush2.msra.mxu0 0.0
        %846 = vmatprep.subr.mxu0 0.0
        %847 = vmatpush2.msra.mxu0 0.0
        %848 = vmatprep.subr.mxu0 0.0
        %849 = vmatpush2.msra.mxu0 0.0
        %850 = vmatprep.mubr.f32.mxu0 0.0
        %851 = vmatmul.mubr.f32.gmra.mxu0 %v784
        %v852 = vpop.f32.mrf.mxu0
        %v853 = vadd.f32 0.0, %v852
        %v854 = vpop.f32.mrf.mxu0
        %855 = vdwg.mxu0
        %856 = vrot.lane.b32.xlu0 %v357, 104
        %v857 = vpop.permute.xlu0 %856
        %858 = vrot.lane.b32.xlu0 %v357, 72
        %v859 = vpop.permute.xlu0 %858
        %v860 = vsel %vm361, %v857, 0
        %v862 = vsel %vm361, %v859, 0
        %864 = vmatprep.subr.mxu0 0.0
        %865 = vmatpush1.xpose.msra.mxu0 0.0
        %866 = vmatprep.subr.mxu0 0.0
        %867 = vmatpush1.xpose.msra.mxu0 0.0
        %868 = vmatprep.subr.mxu0 0.0
        %869 = vmatpush1.xpose.msra.mxu0 0.0
        %870 = vmatprep.subr.mxu0 0.0
        %871 = vmatpush1.xpose.msra.mxu0 0.0
        %872 = vmatprep.subr.mxu0 0.0
        %873 = vmatpush1.xpose.msra.mxu0 0.0
        %874 = vmatprep.subr.mxu0 0.0
        %875 = vmatpush1.xpose.msra.mxu0 0.0
        %876 = vmatprep.subr.mxu0 0.0
        %877 = vmatpush1.xpose.msra.mxu0 0.0
        %878 = vmatprep.subr.mxu0 0.0
        %879 = vmatpush1.xpose.msra.mxu0 0.0
        %880 = vmatprep.subr.mxu0 0.0
        %881 = vmatpush1.xpose.msra.mxu0 0.0
        %882 = vmatprep.subr.mxu0 0.0
        %883 = vmatpush1.xpose.msra.mxu0 0.0
        %884 = vmatprep.subr.mxu0 0.0
        %885 = vmatpush1.xpose.msra.mxu0 0.0
        %886 = vmatprep.subr.mxu0 0.0
        %887 = vmatpush1.xpose.msra.mxu0 0.0
        %888 = vmatprep.subr.mxu0 0.0
        %889 = vmatpush1.xpose.msra.mxu0 0.0
        %890 = vmatprep.subr.mxu0 0.0
        %891 = vmatpush1.xpose.msra.mxu0 0.0
        %892 = vmatprep.subr.mxu0 0.0
        %893 = vmatpush1.xpose.msra.mxu0 0.0
        %894 = vmatprep.subr.mxu0 0.0
        %895 = vmatpush1.xpose.msra.mxu0 %v862
        %896 = vmatprep.subr.mxu0 0.0
        %897 = vmatpush2.xpose.msra.mxu0 0.0
        %898 = vmatprep.subr.mxu0 0.0
        %899 = vmatpush2.xpose.msra.mxu0 0.0
        %900 = vmatprep.subr.mxu0 0.0
        %901 = vmatpush2.xpose.msra.mxu0 0.0
        %902 = vmatprep.subr.mxu0 0.0
        %903 = vmatpush2.xpose.msra.mxu0 0.0
        %904 = vmatprep.subr.mxu0 0.0
        %905 = vmatpush2.xpose.msra.mxu0 0.0
        %906 = vmatprep.subr.mxu0 0.0
        %907 = vmatpush2.xpose.msra.mxu0 0.0
        %908 = vmatprep.subr.mxu0 0.0
        %909 = vmatpush2.xpose.msra.mxu0 0.0
        %910 = vmatprep.subr.mxu0 0.0
        %911 = vmatpush2.xpose.msra.mxu0 0.0
        %912 = vmatprep.subr.mxu0 0.0
        %913 = vmatpush2.xpose.msra.mxu0 0.0
        %914 = vmatprep.subr.mxu0 0.0
        %915 = vmatpush2.xpose.msra.mxu0 0.0
        %916 = vmatprep.subr.mxu0 0.0
        %917 = vmatpush2.xpose.msra.mxu0 0.0
        %918 = vmatprep.subr.mxu0 0.0
        %919 = vmatpush2.xpose.msra.mxu0 0.0
        %920 = vmatprep.subr.mxu0 0.0
        %921 = vmatpush2.xpose.msra.mxu0 0.0
        %922 = vmatprep.subr.mxu0 0.0
        %923 = vmatpush2.xpose.msra.mxu0 0.0
        %924 = vmatprep.subr.mxu0 0.0
        %925 = vmatpush2.xpose.msra.mxu0 0.0
        %926 = vmatprep.subr.mxu0 0.0
        %927 = vmatpush2.xpose.msra.mxu0 0.0
        %928 = vmatprep.mubr.f32.mxu0 0.0
        %929 = vmatmul.mubr.f32.gmra.mxu0 %v860
        %v930 = vpop.f32.mrf.mxu0
        %v931 = vadd.f32 0.0, %v930
        %v932 = vpop.f32.mrf.mxu0
        %933 = vdwg.mxu0
        %v934 = vsel %vm361, %v931, -inf
        %935 = vmax.xlane.f32.xlu0 %v934
        %v936 = vpop.xlane.xlu0 %935
        %v937 = vsub.f32 %v931, %v936
        %v938 = vmul.f32 %v937, 1.442695
        %v939 = vpow.pop %v938
        %v940 = vsel %vm361, %v939, 0.0
        %941 = vadd.xlane.f32.xlu0 %v940
        %v942 = vpop.xlane.xlu0 %941
        %v943 = vrcp.pop %v942
        %v944 = vmul.f32 %v943, 0.35355338
        %v945 = vmul.f32 %v939, %v944
        %946 = vrot.lane.b32.xlu0 %v357, 40
        %v947 = vpop.permute.xlu0 %946
        %v950 = vsel %vm361, %v945, 0
        %952 = vmatprep.subr.mxu0 0.0
        %953 = vmatpush1.msra.mxu0 0.0
        %954 = vmatprep.subr.mxu0 0.0
        %955 = vmatpush1.msra.mxu0 0.0
        %956 = vmatprep.subr.mxu0 0.0
        %957 = vmatpush1.msra.mxu0 0.0
        %958 = vmatprep.subr.mxu0 0.0
        %959 = vmatpush1.msra.mxu0 0.0
        %960 = vmatprep.subr.mxu0 0.0
        %961 = vmatpush1.msra.mxu0 0.0
        %962 = vmatprep.subr.mxu0 0.0
        %963 = vmatpush1.msra.mxu0 0.0
        %964 = vmatprep.subr.mxu0 0.0
        %965 = vmatpush1.msra.mxu0 0.0
        %966 = vmatprep.subr.mxu0 0.0
        %967 = vmatpush1.msra.mxu0 0.0
        %968 = vmatprep.subr.mxu0 0.0
        %969 = vmatpush1.msra.mxu0 0.0
        %970 = vmatprep.subr.mxu0 0.0
        %971 = vmatpush1.msra.mxu0 0.0
        %972 = vmatprep.subr.mxu0 0.0
        %973 = vmatpush1.msra.mxu0 0.0
        %974 = vmatprep.subr.mxu0 0.0
        %975 = vmatpush1.msra.mxu0 0.0
        %976 = vmatprep.subr.mxu0 0.0
        %977 = vmatpush1.msra.mxu0 0.0
        %978 = vmatprep.subr.mxu0 0.0
        %979 = vmatpush1.msra.mxu0 0.0
        %980 = vmatprep.subr.mxu0 0.0
        %981 = vmatpush1.msra.mxu0 0.0
        %982 = vmatprep.subr.mxu0 0.0
        %983 = vmatpush1.msra.mxu0 %v947
        %984 = vmatprep.subr.mxu0 0.0
        %985 = vmatpush2.msra.mxu0 0.0
        %986 = vmatprep.subr.mxu0 0.0
        %987 = vmatpush2.msra.mxu0 0.0
        %988 = vmatprep.subr.mxu0 0.0
        %989 = vmatpush2.msra.mxu0 0.0
        %990 = vmatprep.subr.mxu0 0.0
        %991 = vmatpush2.msra.mxu0 0.0
        %992 = vmatprep.subr.mxu0 0.0
        %993 = vmatpush2.msra.mxu0 0.0
        %994 = vmatprep.subr.mxu0 0.0
        %995 = vmatpush2.msra.mxu0 0.0
        %996 = vmatprep.subr.mxu0 0.0
        %997 = vmatpush2.msra.mxu0 0.0
        %998 = vmatprep.subr.mxu0 0.0
        %999 = vmatpush2.msra.mxu0 0.0
        %1000 = vmatprep.subr.mxu0 0.0
        %1001 = vmatpush2.msra.mxu0 0.0
        %1002 = vmatprep.subr.mxu0 0.0
        %1003 = vmatpush2.msra.mxu0 0.0
        %1004 = vmatprep.subr.mxu0 0.0
        %1005 = vmatpush2.msra.mxu0 0.0
        %1006 = vmatprep.subr.mxu0 0.0
        %1007 = vmatpush2.msra.mxu0 0.0
        %1008 = vmatprep.subr.mxu0 0.0
        %1009 = vmatpush2.msra.mxu0 0.0
        %1010 = vmatprep.subr.mxu0 0.0
        %1011 = vmatpush2.msra.mxu0 0.0
        %1012 = vmatprep.subr.mxu0 0.0
        %1013 = vmatpush2.msra.mxu0 0.0
        %1014 = vmatprep.subr.mxu0 0.0
        %1015 = vmatpush2.msra.mxu0 0.0
        %1016 = vmatprep.mubr.f32.mxu0 0.0
        %1017 = vmatmul.mubr.f32.gmra.mxu0 %v950
        %v1018 = vpop.f32.mrf.mxu0
        %v1019 = vadd.f32 0.0, %v1018
        %v1020 = vpop.f32.mrf.mxu0
        %1021 = vdwg.mxu0
        %1023 = vrot.lane.b32.xlu0 %v687, 8
        %v1024 = vpop.permute.xlu0 %1023
        %1027 = vrot.lane.b32.xlu0 %v853, 16
        %v1028 = vpop.permute.xlu0 %1027
        %1031 = vrot.lane.b32.xlu0 %v1019, 24
        %v1032 = vpop.permute.xlu0 %1031
        %v1034 = vsel %vm361, %v521, %v1024
        %vm1035 = vcmask 130048
        %v1036 = vsel %vm1035, %v1034, %v1028
        %vm1037 = vcmask 195584
        %v1038 = vsel %vm1037, %v1036, %v1032
        %1039 = vst.msk [vmem:[#allocation3] sm:$0xff] %vm281, %v1038
        %v1040 = vld [vmem:[#allocation3] sm:$0xff]
        %v1041 = vld [vmem:[#allocation9] sm:$0xff]
        %v1042 = vld [vmem:[#allocation9 + $0x8] sm:$0xff]
        %v1043 = vld [vmem:[#allocation9 + $0x10] sm:$0xff]
        %v1044 = vld [vmem:[#allocation9 + $0x18] sm:$0xff]
        %v1045 = vld [vmem:[%s4] sm:$0x1]
        %v1047 = vlaneseq
        %v1048 = vshrl.u32 %v1047, 7
        %v1049 = vsub.s32 0, %v1048
        %v1050 = vrot.slane %v1045, %v1049
        %v1053 = vsel %vm281, %v1040, 0
        %1055 = vmatprep.subr.mxu0 0.0
        %1056 = vmatpush1.msra.mxu0 0.0
        %1057 = vmatprep.subr.mxu0 0.0
        %1058 = vmatpush1.msra.mxu0 0.0
        %1059 = vmatprep.subr.mxu0 0.0
        %1060 = vmatpush1.msra.mxu0 0.0
        %1061 = vmatprep.subr.mxu0 0.0
        %1062 = vmatpush1.msra.mxu0 0.0
        %1063 = vmatprep.subr.mxu0 0.0
        %1064 = vmatpush1.msra.mxu0 0.0
        %1065 = vmatprep.subr.mxu0 0.0
        %1066 = vmatpush1.msra.mxu0 0.0
        %1067 = vmatprep.subr.mxu0 0.0
        %1068 = vmatpush1.msra.mxu0 0.0
        %1069 = vmatprep.subr.mxu0 0.0
        %1070 = vmatpush1.msra.mxu0 0.0
        %1071 = vmatprep.subr.mxu0 0.0
        %1072 = vmatpush1.msra.mxu0 0.0
        %1073 = vmatprep.subr.mxu0 0.0
        %1074 = vmatpush1.msra.mxu0 0.0
        %1075 = vmatprep.subr.mxu0 0.0
        %1076 = vmatpush1.msra.mxu0 0.0
        %1077 = vmatprep.subr.mxu0 0.0
        %1078 = vmatpush1.msra.mxu0 0.0
        %1079 = vmatprep.subr.mxu0 0.0
        %1080 = vmatpush1.msra.mxu0 %v1044
        %1081 = vmatprep.subr.mxu0 0.0
        %1082 = vmatpush1.msra.mxu0 %v1043
        %1083 = vmatprep.subr.mxu0 0.0
        %1084 = vmatpush1.msra.mxu0 %v1042
        %1085 = vmatprep.subr.mxu0 0.0
        %1086 = vmatpush1.msra.mxu0 %v1041
        %1087 = vmatprep.subr.mxu0 0.0
        %1088 = vmatpush2.msra.mxu0 0.0
        %1089 = vmatprep.subr.mxu0 0.0
        %1090 = vmatpush2.msra.mxu0 0.0
        %1091 = vmatprep.subr.mxu0 0.0
        %1092 = vmatpush2.msra.mxu0 0.0
        %1093 = vmatprep.subr.mxu0 0.0
        %1094 = vmatpush2.msra.mxu0 0.0
        %1095 = vmatprep.subr.mxu0 0.0
        %1096 = vmatpush2.msra.mxu0 0.0
        %1097 = vmatprep.subr.mxu0 0.0
        %1098 = vmatpush2.msra.mxu0 0.0
        %1099 = vmatprep.subr.mxu0 0.0
        %1100 = vmatpush2.msra.mxu0 0.0
        %1101 = vmatprep.subr.mxu0 0.0
        %1102 = vmatpush2.msra.mxu0 0.0
        %1103 = vmatprep.subr.mxu0 0.0
        %1104 = vmatpush2.msra.mxu0 0.0
        %1105 = vmatprep.subr.mxu0 0.0
        %1106 = vmatpush2.msra.mxu0 0.0
        %1107 = vmatprep.subr.mxu0 0.0
        %1108 = vmatpush2.msra.mxu0 0.0
        %1109 = vmatprep.subr.mxu0 0.0
        %1110 = vmatpush2.msra.mxu0 0.0
        %1111 = vmatprep.subr.mxu0 0.0
        %1112 = vmatpush2.msra.mxu0 0.0
        %1113 = vmatprep.subr.mxu0 0.0
        %1114 = vmatpush2.msra.mxu0 0.0
        %1115 = vmatprep.subr.mxu0 0.0
        %1116 = vmatpush2.msra.mxu0 0.0
        %1117 = vmatprep.subr.mxu0 0.0
        %1118 = vmatpush2.msra.mxu0 0.0
        %1119 = vmatprep.mubr.f32.mxu0 0.0
        %1120 = vmatmul.mubr.f32.gmra.mxu0 %v1053
        %v1121 = vpop.f32.mrf.mxu0
        %v1122 = vadd.f32 %v1050, %v1121
        %v1123 = vpop.f32.mrf.mxu0
        %1124 = vdwg.mxu0
        %1125 = vst.msk [vmem:[%s268] sm:$0xff] %vm281, %v1122
        %s1126 = sand.u32 %s141, 1
        %s1127 = scalar_lea.sflag [#allocation6], %s1126
        %s1128 = sand.u32 %s141, 1
        %s1129 = smul.addr %s1128, 8
        %s1130 = scalar_lea.vmem [#allocation10], %s1129
        // Predicated region
        $region53: #{tpu_custom_call.1} parent=39 // pred_check
          %p1131 = pneg %p151
        $region54: #{tpu_custom_call.1} parent=39 // pred_check_branch
          %1133 = sbr.rel (%p1131) target = $region56
        $region55: #{tpu_custom_call.1} parent=39 // pred_region
          %s1135 = ssub.s32 128, 128
          %1136 = vsyncadd %s1127, %s1135
          %s1137 = smul.addr %s23, 128
          %s1138 = scalar_lea.hbm %s5, %s1137
          %s1140 = sshll.u32 %s1130, 4
          %s1141 = int_to_ptr.vmem [resolvable:$true] %s1140
          %1143 = dma.vmem_to_hbm [thread:$0]  %s1141, 128, %s1138, %s1127
        $region56: #{tpu_custom_call.1} parent=39 // pred_fallthru
          _
      $region40: #{tpu_custom_call.1} parent=5 // pred_fallthru
        _
      %p1144 = scmp.le.s32.totalorder 2, %s18
      // Predicated region
      $region57: #{tpu_custom_call.1} parent=5 // pred_check
        %p1145 = pneg %p1144
      $region58: #{tpu_custom_call.1} parent=5 // pred_check_branch
        %1147 = sbr.rel (%p1145) target = $region60
      $region59: #{tpu_custom_call.1} parent=5 // pred_region
        %s1148 = ssub.s32 %s18, 2
        // Predicated region
        $region61: #{tpu_custom_call.1} parent=59 // pred_check
          %p1149 = pneg %p157
        $region62: #{tpu_custom_call.1} parent=59 // pred_check_branch
          %1151 = sbr.rel (%p1149) target = $region64
        $region63: #{tpu_custom_call.1} parent=59 // pred_region
          %s1152 = sand.u32 %s142, 1
          %s1153 = scalar_lea.sflag [#allocation6], %s1152
          %s1154 = sand.u32 %s142, 1
          %s1155 = smul.addr %s1154, 8
          %s1156 = scalar_lea.vmem [#allocation10], %s1155
          %1157 = dma.done %s1153, 128
        $region64: #{tpu_custom_call.1} parent=59 // pred_fallthru
          _
      $region60: #{tpu_custom_call.1} parent=5 // pred_fallthru
        _
    $region6: #{tpu_custom_call.1} parent=1 // loop_footer
      %s22 = sadd.s32 1, %s18
    $region7: #{tpu_custom_call.1} parent=1 // loop_footer_branch
      %17 = sbr.rel target = $region3
    $region8: #{tpu_custom_call.1} parent=1 // loop_exit
      _
    %1158 = vsyncpa [#allocation5], 1
    %s1159 = scalar_lea.sflag [#allocation5], 1
    %1160 = vsyncpa %s1159, 1
    %1161 = vsyncpa [#allocation8], 1
    %1162 = vsyncpa [#allocation6], 1
    %s1163 = scalar_lea.sflag [#allocation6], 1
    %1164 = vsyncpa %s1163, 1

// kernel: tpu_custom_call.1
$region0: #{tpu_custom_call.1}
  #allocation0 [shape = 'u32[]', space=smem, size = 0x4, offset = 0x4, fixed_abs, tag = 'smem constant byte address 0x4 - core index']
  #allocation1 [shape = 'u32[144,128]{1,0:T(1,128)}', space=vmem, size = 0x12000, scoped, tag = 'internal scratch']
  #allocation2 [shape = 'f32[8,96]{1,0:T(8,128)}', space=vmem, size = 0x1000, scoped, tag = 'scratch operand']
  #allocation3 [shape = 'f32[8,32]{1,0:T(8,128)}', space=vmem, size = 0x1000, scoped, tag = 'scratch operand']
  %s0 = inlined_call_operand.hbm [shape: f32[16,32], index: 0, kind: input, shape index: {}]
  %s1 = inlined_call_operand.hbm [shape: f32[32,96], index: 1, kind: input, shape index: {}]
  %s2 = inlined_call_operand.vmem [shape: f32[1,96], index: 2, kind: input, shape index: {}]
  %s3 = inlined_call_operand.hbm [shape: f32[32,32], index: 3, kind: input, shape index: {}]
  %s4 = inlined_call_operand.vmem [shape: f32[1,32], index: 4, kind: input, shape index: {}]
  %s5 = inlined_call_operand.hbm [shape: f32[16,32], index: 5, kind: output, shape index: {}]
  %s6 = sld [smem:[#allocation0]]
  $region65: #{tpu_custom_call.1} parent=0
    _
  %s8 = ssub.s32 1, %s6
  %s9 = scalar_select 0, %s8, %s6
  $region1: #{tpu_custom_call.1} parent=0
    #allocation4 [shape = 'u8[8192]{0}', space=vmem, size = 0x2000, scoped, tag = 'input window, operand 0']
    #allocation5 [shape = 's32[2]{0}', space=sflag, size = 0x8, scoped, tag = 'scoped memory for tpu_custom_call.1']
    #allocation6 [shape = 's32[2]{0}', space=sflag, size = 0x8, scoped, tag = 'scoped memory for tpu_custom_call.1']
    #allocation7 [shape = 'u8[16384]{0}', space=vmem, size = 0x4000, scoped, tag = 'input window, operand 1, single buffered']
    #allocation8 [shape = 's32[1]{0}', space=sflag, size = 0x4, scoped, tag = 'scoped memory for tpu_custom_call.1']
    #allocation9 [shape = 'u8[16384]{0}', space=vmem, size = 0x4000, scoped, tag = 'input window, operand 3, single buffered']
    #allocation10 [shape = 'u8[8192]{0}', space=vmem, size = 0x2000, scoped, tag = 'output window, operand 0']
    %10 = vsyncpa [#allocation5], 0
    %s11 = scalar_lea.sflag [#allocation5], 1
    %12 = vsyncpa %s11, 0
    %13 = vsyncpa [#allocation8], 0
    %14 = vsyncpa [#allocation6], 0
    %s15 = scalar_lea.sflag [#allocation6], 1
    %16 = vsyncpa %s15, 0
    loop: start=0, step=1, limit=4
    $region2: #{tpu_custom_call.1} parent=1 // loop_pre_header
      _
    $region3: #{tpu_custom_call.1} parent=1 // loop_header
      %s18 = sphi 0, %s22
      %p19 = scmp.ge.s32.totalorder %s18, 4
      %s28 = sphi 0, %s30
      %s31 = sphi 0, %s28
      %s32 = sphi 0, %s31
      %s48 = sphi 0, %s32
      %s52 = sphi 0, %s52
      %s54 = sphi 0, %s52
      %s55 = sphi 0, %s54
      %s69 = sphi 0, %s55
      %s73 = sphi 0, %s73
      %s75 = sphi 0, %s73
      %s76 = sphi 0, %s75
      %s90 = sphi 0, %s76
      %s94 = sphi 0, %s94
      %s96 = sphi 0, %s94
      %s97 = sphi 0, %s96
      %s111 = sphi 0, %s97
      %s115 = sphi 0, %s115
      %s117 = sphi 0, %s115
      %s118 = sphi 0, %s117
      %s132 = sphi 0, %s118
      %s138 = sphi 0, %s140
      %s141 = sphi 0, %s138
      %s142 = sphi 0, %s141
      %s158 = sphi 0, %s142
    $region4: #{tpu_custom_call.1} parent=1 // loop_header_branch
      %21 = sbr.rel (%p19) target = $region8
    $region5: #{tpu_custom_call.1} parent=1 // loop_body
      %s23 = ssub.s32 %s18, 1
      %s24 = ssub.s32 %s18, 2
      %s25 = sadd.s32 %s18, 1
      %s26 = ssub.s32 %s18, %s25
      %p27 = scmp.eq.s32.totalorder %s26, 0
      %s29 = sadd.s32 %s28, 1
      %s30 = scalar_select %p27, %s28, %s29
      %p33 = pneg %p27
      %p34 = scmp.eq.s32.totalorder %s18, 1
      %p35 = por %p33, %p34
      %p36 = scmp.ne.s32.totalorder %s28, %s31
      %p37 = scmp.eq.s32.totalorder %s18, 0
      %p38 = por %p36, %p37
      %p39 = scmp.ne.s32.totalorder %s28, %s31
      %p40 = scmp.eq.s32.totalorder %s23, 1
      %p41 = por %p39, %p40
      %p42 = scmp.ne.s32.totalorder %s31, %s32
      %p43 = scmp.eq.s32.totalorder %s23, 0
      %p44 = por %p42, %p43
      %p45 = scmp.ne.s32.totalorder %s31, %s32
      %p46 = scmp.eq.s32.totalorder %s24, 1
      %p47 = por %p45, %p46
      %p49 = scmp.ne.s32.totalorder %s32, %s48
      %p50 = scmp.eq.s32.totalorder %s24, 0
      %p51 = por %p49, %p50
      %s53 = sadd.s32 %s52, 1
      %p56 = scmp.eq.s32.totalorder %s18, 1
      %p57 = scmp.ne.s32.totalorder %s52, %s54
      %p58 = scmp.eq.s32.totalorder %s18, 0
      %p59 = por %p57, %p58
      %p60 = scmp.ne.s32.totalorder %s52, %s54
      %p61 = scmp.eq.s32.totalorder %s23, 1
      %p62 = por %p60, %p61
      %p63 = scmp.ne.s32.totalorder %s54, %s55
      %p64 = scmp.eq.s32.totalorder %s23, 0
      %p65 = por %p63, %p64
      %p66 = scmp.ne.s32.totalorder %s54, %s55
      %p67 = scmp.eq.s32.totalorder %s24, 1
      %p68 = por %p66, %p67
      %p70 = scmp.ne.s32.totalorder %s55, %s69
      %p71 = scmp.eq.s32.totalorder %s24, 0
      %p72 = por %p70, %p71
      %s74 = sadd.s32 %s73, 1
      %p77 = scmp.eq.s32.totalorder %s18, 1
      %p78 = scmp.ne.s32.totalorder %s73, %s75
      %p79 = scmp.eq.s32.totalorder %s18, 0
      %p80 = por %p78, %p79
      %p81 = scmp.ne.s32.totalorder %s73, %s75
      %p82 = scmp.eq.s32.totalorder %s23, 1
      %p83 = por %p81, %p82
      %p84 = scmp.ne.s32.totalorder %s75, %s76
      %p85 = scmp.eq.s32.totalorder %s23, 0
      %p86 = por %p84, %p85
      %p87 = scmp.ne.s32.totalorder %s75, %s76
      %p88 = scmp.eq.s32.totalorder %s24, 1
      %p89 = por %p87, %p88
      %p91 = scmp.ne.s32.totalorder %s76, %s90
      %p92 = scmp.eq.s32.totalorder %s24, 0
      %p93 = por %p91, %p92
      %s95 = sadd.s32 %s94, 1
      %p98 = scmp.eq.s32.totalorder %s18, 1
      %p99 = scmp.ne.s32.totalorder %s94, %s96
      %p100 = scmp.eq.s32.totalorder %s18, 0
      %p101 = por %p99, %p100
      %p102 = scmp.ne.s32.totalorder %s94, %s96
      %p103 = scmp.eq.s32.totalorder %s23, 1
      %p104 = por %p102, %p103
      %p105 = scmp.ne.s32.totalorder %s96, %s97
      %p106 = scmp.eq.s32.totalorder %s23, 0
      %p107 = por %p105, %p106
      %p108 = scmp.ne.s32.totalorder %s96, %s97
      %p109 = scmp.eq.s32.totalorder %s24, 1
      %p110 = por %p108, %p109
      %p112 = scmp.ne.s32.totalorder %s97, %s111
      %p113 = scmp.eq.s32.totalorder %s24, 0
      %p114 = por %p112, %p113
      %s116 = sadd.s32 %s115, 1
      %p119 = scmp.eq.s32.totalorder %s18, 1
      %p120 = scmp.ne.s32.totalorder %s115, %s117
      %p121 = scmp.eq.s32.totalorder %s18, 0
      %p122 = por %p120, %p121
      %p123 = scmp.ne.s32.totalorder %s115, %s117
      %p124 = scmp.eq.s32.totalorder %s23, 1
      %p125 = por %p123, %p124
      %p126 = scmp.ne.s32.totalorder %s117, %s118
      %p127 = scmp.eq.s32.totalorder %s23, 0
      %p128 = por %p126, %p127
      %p129 = scmp.ne.s32.totalorder %s117, %s118
      %p130 = scmp.eq.s32.totalorder %s24, 1
      %p131 = por %p129, %p130
      %p133 = scmp.ne.s32.totalorder %s118, %s132
      %p134 = scmp.eq.s32.totalorder %s24, 0
      %p135 = por %p133, %p134
      %s136 = ssub.s32 %s18, %s25
      %p137 = scmp.eq.s32.totalorder %s136, 0
      %s139 = sadd.s32 %s138, 1
      %s140 = scalar_select %p137, %s138, %s139
      %p143 = pneg %p137
      %p144 = scmp.eq.s32.totalorder %s18, 1
      %p145 = por %p143, %p144
      %p146 = scmp.ne.s32.totalorder %s138, %s141
      %p147 = scmp.eq.s32.totalorder %s18, 0
      %p148 = por %p146, %p147
      %p149 = scmp.ne.s32.totalorder %s138, %s141
      %p150 = scmp.eq.s32.totalorder %s23, 1
      %p151 = por %p149, %p150
      %p152 = scmp.ne.s32.totalorder %s141, %s142
      %p153 = scmp.eq.s32.totalorder %s23, 0
      %p154 = por %p152, %p153
      %p155 = scmp.ne.s32.totalorder %s141, %s142
      %p156 = scmp.eq.s32.totalorder %s24, 1
      %p157 = por %p155, %p156
      %p159 = scmp.ne.s32.totalorder %s142, %s158
      %p160 = scmp.eq.s32.totalorder %s24, 0
      %p161 = por %p159, %p160
      %p162 = scmp.le.s32.totalorder 1, %s18
      %p163 = scmp.lt.s32.totalorder %s18, 3
      %p164 = pnand %p162, %p163
      %p165 = pneg %p164
      // Predicated region
      $region9: #{tpu_custom_call.1} parent=5 // pred_check
        _
      $region10: #{tpu_custom_call.1} parent=5 // pred_check_branch
        %167 = sbr.rel (%p164) target = $region12
      $region11: #{tpu_custom_call.1} parent=5 // pred_region
        %s168 = ssub.s32 %s18, 1
        // Predicated region
        $region13: #{tpu_custom_call.1} parent=11 // pred_check
          %p169 = pneg %p65
        $region14: #{tpu_custom_call.1} parent=11 // pred_check_branch
          %171 = sbr.rel (%p169) target = $region16
        $region15: #{tpu_custom_call.1} parent=11 // pred_region
          %s173 = ssub.s32 512, 512
          %174 = vsyncadd [#allocation8], %s173
          %s175 = sshll.u32 [#allocation7], 4
          %s176 = int_to_ptr.vmem [resolvable:$true] %s175
          %181 = dma.hbm_to_vmem [thread:$0]  %s1, 512, %s176, [#allocation8], 128, 128, 8
        $region16: #{tpu_custom_call.1} parent=11 // pred_fallthru
          _
        // Predicated region
        $region17: #{tpu_custom_call.1} parent=11 // pred_check
          %p182 = pneg %p86
        $region18: #{tpu_custom_call.1} parent=11 // pred_check_branch
          %184 = sbr.rel (%p182) target = $region20
        $region19: #{tpu_custom_call.1} parent=11 // pred_region
          _
        $region20: #{tpu_custom_call.1} parent=11 // pred_fallthru
          _
        // Predicated region
        $region21: #{tpu_custom_call.1} parent=11 // pred_check
          %p185 = pneg %p107
        $region22: #{tpu_custom_call.1} parent=11 // pred_check_branch
          %187 = sbr.rel (%p185) target = $region24
        $region23: #{tpu_custom_call.1} parent=11 // pred_region
          %s189 = ssub.s32 512, 512
          %190 = vsyncadd [#allocation8], %s189
          %s191 = sshll.u32 [#allocation9], 4
          %s192 = int_to_ptr.vmem [resolvable:$true] %s191
          %197 = dma.hbm_to_vmem [thread:$0]  %s3, 512, %s192, [#allocation8], 128, 128, 8
        $region24: #{tpu_custom_call.1} parent=11 // pred_fallthru
          _
        // Predicated region
        $region25: #{tpu_custom_call.1} parent=11 // pred_check
          %p198 = pneg %p128
        $region26: #{tpu_custom_call.1} parent=11 // pred_check_branch
          %200 = sbr.rel (%p198) target = $region28
        $region27: #{tpu_custom_call.1} parent=11 // pred_region
          _
        $region28: #{tpu_custom_call.1} parent=11 // pred_fallthru
          _
      $region12: #{tpu_custom_call.1} parent=5 // pred_fallthru
        _
      %p201 = scmp.lt.s32.totalorder %s18, 2
      // Predicated region
      $region29: #{tpu_custom_call.1} parent=5 // pred_check
        %p202 = pneg %p201
      $region30: #{tpu_custom_call.1} parent=5 // pred_check_branch
        %204 = sbr.rel (%p202) target = $region32
      $region31: #{tpu_custom_call.1} parent=5 // pred_region
        // Predicated region
        $region33: #{tpu_custom_call.1} parent=31 // pred_check
          %p205 = pneg %p38
        $region34: #{tpu_custom_call.1} parent=31 // pred_check_branch
          %207 = sbr.rel (%p205) target = $region36
        $region35: #{tpu_custom_call.1} parent=31 // pred_region
          %s208 = sand.u32 %s28, 1
          %s209 = scalar_lea.sflag [#allocation5], %s208
          %s210 = sand.u32 %s28, 1
          %s211 = smul.addr %s210, 8
          %s212 = scalar_lea.vmem [#allocation4], %s211
          %s214 = ssub.s32 128, 128
          %215 = vsyncadd %s209, %s214
          %s216 = smul.addr %s18, 128
          %s217 = scalar_lea.hbm %s0, %s216
          %s219 = sshll.u32 %s212, 4
          %s220 = int_to_ptr.vmem [resolvable:$true] %s219
          %222 = dma.hbm_to_vmem [thread:$0]  %s217, 128, %s220, %s209
        $region36: #{tpu_custom_call.1} parent=31 // pred_fallthru
          _
      $region32: #{tpu_custom_call.1} parent=5 // pred_fallthru
        _
      %p223 = scmp.le.s32.totalorder 1, %s18
      %p224 = scmp.lt.s32.totalorder %s18, 3
      %p225 = pnand %p223, %p224
      %p226 = pneg %p225
      // Predicated region
      $region37: #{tpu_custom_call.1} parent=5 // pred_check
        _
      $region38: #{tpu_custom_call.1} parent=5 // pred_check_branch
        %228 = sbr.rel (%p225) target = $region40
      $region39: #{tpu_custom_call.1} parent=5 // pred_region
        %s229 = ssub.s32 %s18, 1
        %s230 = sand.u32 %s31, 1
        %s231 = scalar_lea.sflag [#allocation5], %s230
        %s232 = sand.u32 %s31, 1
        %s233 = smul.addr %s232, 8
        %s234 = scalar_lea.vmem [#allocation4], %s233
        // Predicated region
        $region41: #{tpu_custom_call.1} parent=39 // pred_check
          %p235 = pneg %p44
        $region42: #{tpu_custom_call.1} parent=39 // pred_check_branch
          %237 = sbr.rel (%p235) target = $region44
        $region43: #{tpu_custom_call.1} parent=39 // pred_region
          %238 = dma.done %s231, 128
        $region44: #{tpu_custom_call.1} parent=39 // pred_fallthru
          _
        // Predicated region
        $region45: #{tpu_custom_call.1} parent=39 // pred_check
          %p239 = pneg %p65
        $region46: #{tpu_custom_call.1} parent=39 // pred_check_branch
          %241 = sbr.rel (%p239) target = $region48
        $region47: #{tpu_custom_call.1} parent=39 // pred_region
          %242 = dma.done [#allocation8], 512
        $region48: #{tpu_custom_call.1} parent=39 // pred_fallthru
          _
        // Predicated region
        $region49: #{tpu_custom_call.1} parent=39 // pred_check
          %p243 = pneg %p107
        $region50: #{tpu_custom_call.1} parent=39 // pred_check_branch
          %245 = sbr.rel (%p243) target = $region52
        $region51: #{tpu_custom_call.1} parent=39 // pred_region
          %246 = dma.done [#allocation8], 512
        $region52: #{tpu_custom_call.1} parent=39 // pred_fallthru
          _
        %s247 = sand.u32 %s31, 1
        %s248 = scalar_lea.sflag [#allocation5], %s247
        %s249 = sand.u32 %s31, 1
        %s250 = smul.addr %s249, 8
        %s251 = scalar_lea.vmem [#allocation4], %s250
        %p252 = pneg %p44
        %p253 = pneg %p41
        %p254 = pneg %p65
        %p255 = pneg %p62
        %p256 = pneg %p86
        %p257 = pneg %p83
        %p258 = pneg %p107
        %p259 = pneg %p104
        %p260 = pneg %p128
        %p261 = pneg %p125
        %p262 = pneg %p154
        %p263 = pneg %p151
        %s264 = sand.u32 %s141, 1
        %s265 = scalar_lea.sflag [#allocation6], %s264
        %s266 = sand.u32 %s141, 1
        %s267 = smul.addr %s266, 8
        %s268 = scalar_lea.vmem [#allocation10], %s267
        %v269 = vld [vmem:[%s234] sm:$0xff]
        %v270 = vld [vmem:[#allocation7] sm:$0xff]
        %v271 = vld [vmem:[#allocation7 + $0x8] sm:$0xff]
        %v272 = vld [vmem:[#allocation7 + $0x10] sm:$0xff]
        %v273 = vld [vmem:[#allocation7 + $0x18] sm:$0xff]
        %v274 = vld [vmem:[%s2] sm:$0x1]
        %v276 = vlaneseq
        %v277 = vshrl.u32 %v276, 7
        %v278 = vsub.s32 0, %v277
        %v279 = vrot.slane %v274, %v278
        %vm281 = vcmask 261120
        %v283 = vsel %vm281, %v269, 0
        %285 = vmatprep.subr.mxu0 0.0
        %286 = vmatpush1.msra.mxu0 0.0
        %287 = vmatprep.subr.mxu0 0.0
        %288 = vmatpush1.msra.mxu0 0.0
        %289 = vmatprep.subr.mxu0 0.0
        %290 = vmatpush1.msra.mxu0 0.0
        %291 = vmatprep.subr.mxu0 0.0
        %292 = vmatpush1.msra.mxu0 0.0
        %293 = vmatprep.subr.mxu0 0.0
        %294 = vmatpush1.msra.mxu0 0.0
        %295 = vmatprep.subr.mxu0 0.0
        %296 = vmatpush1.msra.mxu0 0.0
        %297 = vmatprep.subr.mxu0 0.0
        %298 = vmatpush1.msra.mxu0 0.0
        %299 = vmatprep.subr.mxu0 0.0
        %300 = vmatpush1.msra.mxu0 0.0
        %301 = vmatprep.subr.mxu0 0.0
        %302 = vmatpush1.msra.mxu0 0.0
        %303 = vmatprep.subr.mxu0 0.0
        %304 = vmatpush1.msra.mxu0 0.0
        %305 = vmatprep.subr.mxu0 0.0
        %306 = vmatpush1.msra.mxu0 0.0
        %307 = vmatprep.subr.mxu0 0.0
        %308 = vmatpush1.msra.mxu0 0.0
        %309 = vmatprep.subr.mxu0 0.0
        %310 = vmatpush1.msra.mxu0 %v273
        %311 = vmatprep.subr.mxu0 0.0
        %312 = vmatpush1.msra.mxu0 %v272
        %313 = vmatprep.subr.mxu0 0.0
        %314 = vmatpush1.msra.mxu0 %v271
        %315 = vmatprep.subr.mxu0 0.0
        %316 = vmatpush1.msra.mxu0 %v270
        %317 = vmatprep.subr.mxu0 0.0
        %318 = vmatpush2.msra.mxu0 0.0
        %319 = vmatprep.subr.mxu0 0.0
        %320 = vmatpush2.msra.mxu0 0.0
        %321 = vmatprep.subr.mxu0 0.0
        %322 = vmatpush2.msra.mxu0 0.0
        %323 = vmatprep.subr.mxu0 0.0
        %324 = vmatpush2.msra.mxu0 0.0
        %325 = vmatprep.subr.mxu0 0.0
        %326 = vmatpush2.msra.mxu0 0.0
        %327 = vmatprep.subr.mxu0 0.0
        %328 = vmatpush2.msra.mxu0 0.0
        %329 = vmatprep.subr.mxu0 0.0
        %330 = vmatpush2.msra.mxu0 0.0
        %331 = vmatprep.subr.mxu0 0.0
        %332 = vmatpush2.msra.mxu0 0.0
        %333 = vmatprep.subr.mxu0 0.0
        %334 = vmatpush2.msra.mxu0 0.0
        %335 = vmatprep.subr.mxu0 0.0
        %336 = vmatpush2.msra.mxu0 0.0
        %337 = vmatprep.subr.mxu0 0.0
        %338 = vmatpush2.msra.mxu0 0.0
        %339 = vmatprep.subr.mxu0 0.0
        %340 = vmatpush2.msra.mxu0 0.0
        %341 = vmatprep.subr.mxu0 0.0
        %342 = vmatpush2.msra.mxu0 0.0
        %343 = vmatprep.subr.mxu0 0.0
        %344 = vmatpush2.msra.mxu0 0.0
        %345 = vmatprep.subr.mxu0 0.0
        %346 = vmatpush2.msra.mxu0 0.0
        %347 = vmatprep.subr.mxu0 0.0
        %348 = vmatpush2.msra.mxu0 0.0
        %349 = vmatprep.mubr.f32.mxu0 0.0
        %350 = vmatmul.mubr.f32.gmra.mxu0 %v283
        %v351 = vpop.f32.mrf.mxu0
        %v352 = vadd.f32 %v279, %v351
        %v353 = vpop.f32.mrf.mxu0
        %354 = vdwg.mxu0
        %vm355 = vcmask 785408
        %356 = vst.msk [vmem:[#allocation2] sm:$0xff] %vm355, %v352
        %v357 = vld [vmem:[#allocation2] sm:$0xff]
        %359 = vrot.lane.b32.xlu0 %v357, 96
        %v360 = vpop.permute.xlu0 %359
        %vm361 = vcmask 64512
        %v362 = vsel %vm361, %v357, 0
        %v364 = vsel %vm361, %v360, 0
        %366 = vmatprep.subr.mxu0 0.0
        %367 = vmatpush1.xpose.msra.mxu0 0.0
        %368 = vmatprep.subr.mxu0 0.0
        %369 = vmatpush1.xpose.msra.mxu0 0.0
        %370 = vmatprep.subr.mxu0 0.0
        %371 = vmatpush1.xpose.msra.mxu0 0.0
        %372 = vmatprep.subr.mxu0 0.0
        %373 = vmatpush1.xpose.msra.mxu0 0.0
        %374 = vmatprep.subr.mxu0 0.0
        %375 = vmatpush1.xpose.msra.mxu0 0.0
        %376 = vmatprep.subr.mxu0 0.0
        %377 = vmatpush1.xpose.msra.mxu0 0.0
        %378 = vmatprep.subr.mxu0 0.0
        %379 = vmatpush1.xpose.msra.mxu0 0.0
        %380 = vmatprep.subr.mxu0 0.0
        %381 = vmatpush1.xpose.msra.mxu0 0.0
        %382 = vmatprep.subr.mxu0 0.0
        %383 = vmatpush1.xpose.msra.mxu0 0.0
        %384 = vmatprep.subr.mxu0 0.0
        %385 = vmatpush1.xpose.msra.mxu0 0.0
        %386 = vmatprep.subr.mxu0 0.0
        %387 = vmatpush1.xpose.msra.mxu0 0.0
        %388 = vmatprep.subr.mxu0 0.0
        %389 = vmatpush1.xpose.msra.mxu0 0.0
        %390 = vmatprep.subr.mxu0 0.0
        %391 = vmatpush1.xpose.msra.mxu0 0.0
        %392 = vmatprep.subr.mxu0 0.0
        %393 = vmatpush1.xpose.msra.mxu0 0.0
        %394 = vmatprep.subr.mxu0 0.0
        %395 = vmatpush1.xpose.msra.mxu0 0.0
        %396 = vmatprep.subr.mxu0 0.0
        %397 = vmatpush1.xpose.msra.mxu0 %v364
        %398 = vmatprep.subr.mxu0 0.0
        %399 = vmatpush2.xpose.msra.mxu0 0.0
        %400 = vmatprep.subr.mxu0 0.0
        %401 = vmatpush2.xpose.msra.mxu0 0.0
        %402 = vmatprep.subr.mxu0 0.0
        %403 = vmatpush2.xpose.msra.mxu0 0.0
        %404 = vmatprep.subr.mxu0 0.0
        %405 = vmatpush2.xpose.msra.mxu0 0.0
        %406 = vmatprep.subr.mxu0 0.0
        %407 = vmatpush2.xpose.msra.mxu0 0.0
        %408 = vmatprep.subr.mxu0 0.0
        %409 = vmatpush2.xpose.msra.mxu0 0.0
        %410 = vmatprep.subr.mxu0 0.0
        %411 = vmatpush2.xpose.msra.mxu0 0.0
        %412 = vmatprep.subr.mxu0 0.0
        %413 = vmatpush2.xpose.msra.mxu0 0.0
        %414 = vmatprep.subr.mxu0 0.0
        %415 = vmatpush2.xpose.msra.mxu0 0.0
        %416 = vmatprep.subr.mxu0 0.0
        %417 = vmatpush2.xpose.msra.mxu0 0.0
        %418 = vmatprep.subr.mxu0 0.0
        %419 = vmatpush2.xpose.msra.mxu0 0.0
        %420 = vmatprep.subr.mxu0 0.0
        %421 = vmatpush2.xpose.msra.mxu0 0.0
        %422 = vmatprep.subr.mxu0 0.0
        %423 = vmatpush2.xpose.msra.mxu0 0.0
        %424 = vmatprep.subr.mxu0 0.0
        %425 = vmatpush2.xpose.msra.mxu0 0.0
        %426 = vmatprep.subr.mxu0 0.0
        %427 = vmatpush2.xpose.msra.mxu0 0.0
        %428 = vmatprep.subr.mxu0 0.0
        %429 = vmatpush2.xpose.msra.mxu0 0.0
        %430 = vmatprep.mubr.f32.mxu0 0.0
        %431 = vmatmul.mubr.f32.gmra.mxu0 %v362
        %v432 = vpop.f32.mrf.mxu0
        %v433 = vadd.f32 0.0, %v432
        %v434 = vpop.f32.mrf.mxu0
        %435 = vdwg.mxu0
        %v436 = vsel %vm361, %v433, -inf
        %437 = vmax.xlane.f32.xlu0 %v436
        %v438 = vpop.xlane.xlu0 %437
        %v439 = vsub.f32 %v433, %v438
        %v440 = vmul.f32 %v439, 1.442695
        %v441 = vpow.pop %v440
        %v442 = vsel %vm361, %v441, 0.0
        %443 = vadd.xlane.f32.xlu0 %v442
        %v444 = vpop.xlane.xlu0 %443
        %v445 = vrcp.pop %v444
        %v446 = vmul.f32 %v445, 0.35355338
        %v447 = vmul.f32 %v441, %v446
        %448 = vrot.lane.b32.xlu0 %v357, 64
        %v449 = vpop.permute.xlu0 %448
        %v452 = vsel %vm361, %v447, 0
        %454 = vmatprep.subr.mxu0 0.0
        %455 = vmatpush1.msra.mxu0 0.0
        %456 = vmatprep.subr.mxu0 0.0
        %457 = vmatpush1.msra.mxu0 0.0
        %458 = vmatprep.subr.mxu0 0.0
        %459 = vmatpush1.msra.mxu0 0.0
        %460 = vmatprep.subr.mxu0 0.0
        %461 = vmatpush1.msra.mxu0 0.0
        %462 = vmatprep.subr.mxu0 0.0
        %463 = vmatpush1.msra.mxu0 0.0
        %464 = vmatprep.subr.mxu0 0.0
        %465 = vmatpush1.msra.mxu0 0.0
        %466 = vmatprep.subr.mxu0 0.0
        %467 = vmatpush1.msra.mxu0 0.0
        %468 = vmatprep.subr.mxu0 0.0
        %469 = vmatpush1.msra.mxu0 0.0
        %470 = vmatprep.subr.mxu0 0.0
        %471 = vmatpush1.msra.mxu0 0.0
        %472 = vmatprep.subr.mxu0 0.0
        %473 = vmatpush1.msra.mxu0 0.0
        %474 = vmatprep.subr.mxu0 0.0
        %475 = vmatpush1.msra.mxu0 0.0
        %476 = vmatprep.subr.mxu0 0.0
        %477 = vmatpush1.msra.mxu0 0.0
        %478 = vmatprep.subr.mxu0 0.0
        %479 = vmatpush1.msra.mxu0 0.0
        %480 = vmatprep.subr.mxu0 0.0
        %481 = vmatpush1.msra.mxu0 0.0
        %482 = vmatprep.subr.mxu0 0.0
        %483 = vmatpush1.msra.mxu0 0.0
        %484 = vmatprep.subr.mxu0 0.0
        %485 = vmatpush1.msra.mxu0 %v449
        %486 = vmatprep.subr.mxu0 0.0
        %487 = vmatpush2.msra.mxu0 0.0
        %488 = vmatprep.subr.mxu0 0.0
        %489 = vmatpush2.msra.mxu0 0.0
        %490 = vmatprep.subr.mxu0 0.0
        %491 = vmatpush2.msra.mxu0 0.0
        %492 = vmatprep.subr.mxu0 0.0
        %493 = vmatpush2.msra.mxu0 0.0
        %494 = vmatprep.subr.mxu0 0.0
        %495 = vmatpush2.msra.mxu0 0.0
        %496 = vmatprep.subr.mxu0 0.0
        %497 = vmatpush2.msra.mxu0 0.0
        %498 = vmatprep.subr.mxu0 0.0
        %499 = vmatpush2.msra.mxu0 0.0
        %500 = vmatprep.subr.mxu0 0.0
        %501 = vmatpush2.msra.mxu0 0.0
        %502 = vmatprep.subr.mxu0 0.0
        %503 = vmatpush2.msra.mxu0 0.0
        %504 = vmatprep.subr.mxu0 0.0
        %505 = vmatpush2.msra.mxu0 0.0
        %506 = vmatprep.subr.mxu0 0.0
        %507 = vmatpush2.msra.mxu0 0.0
        %508 = vmatprep.subr.mxu0 0.0
        %509 = vmatpush2.msra.mxu0 0.0
        %510 = vmatprep.subr.mxu0 0.0
        %511 = vmatpush2.msra.mxu0 0.0
        %512 = vmatprep.subr.mxu0 0.0
        %513 = vmatpush2.msra.mxu0 0.0
        %514 = vmatprep.subr.mxu0 0.0
        %515 = vmatpush2.msra.mxu0 0.0
        %516 = vmatprep.subr.mxu0 0.0
        %517 = vmatpush2.msra.mxu0 0.0
        %518 = vmatprep.mubr.f32.mxu0 0.0
        %519 = vmatmul.mubr.f32.gmra.mxu0 %v452
        %v520 = vpop.f32.mrf.mxu0
        %v521 = vadd.f32 0.0, %v520
        %v522 = vpop.f32.mrf.mxu0
        %523 = vdwg.mxu0
        %524 = vrot.lane.b32.xlu0 %v357, 120
        %v525 = vpop.permute.xlu0 %524
        %526 = vrot.lane.b32.xlu0 %v357, 88
        %v527 = vpop.permute.xlu0 %526
        %v528 = vsel %vm361, %v525, 0
        %v530 = vsel %vm361, %v527, 0
        %532 = vmatprep.subr.mxu0 0.0
        %533 = vmatpush1.xpose.msra.mxu0 0.0
        %534 = vmatprep.subr.mxu0 0.0
        %535 = vmatpush1.xpose.msra.mxu0 0.0
        %536 = vmatprep.subr.mxu0 0.0
        %537 = vmatpush1.xpose.msra.mxu0 0.0
        %538 = vmatprep.subr.mxu0 0.0
        %539 = vmatpush1.xpose.msra.mxu0 0.0
        %540 = vmatprep.subr.mxu0 0.0
        %541 = vmatpush1.xpose.msra.mxu0 0.0
        %542 = vmatprep.subr.mxu0 0.0
        %543 = vmatpush1.xpose.msra.mxu0 0.0
        %544 = vmatprep.subr.mxu0 0.0
        %545 = vmatpush1.xpose.msra.mxu0 0.0
        %546 = vmatprep.subr.mxu0 0.0
        %547 = vmatpush1.xpose.msra.mxu0 0.0
        %548 = vmatprep.subr.mxu0 0.0
        %549 = vmatpush1.xpose.msra.mxu0 0.0
        %550 = vmatprep.subr.mxu0 0.0
        %551 = vmatpush1.xpose.msra.mxu0 0.0
        %552 = vmatprep.subr.mxu0 0.0
        %553 = vmatpush1.xpose.msra.mxu0 0.0
        %554 = vmatprep.subr.mxu0 0.0
        %555 = vmatpush1.xpose.msra.mxu0 0.0
        %556 = vmatprep.subr.mxu0 0.0
        %557 = vmatpush1.xpose.msra.mxu0 0.0
        %558 = vmatprep.subr.mxu0 0.0
        %559 = vmatpush1.xpose.msra.mxu0 0.0
        %560 = vmatprep.subr.mxu0 0.0
        %561 = vmatpush1.xpose.msra.mxu0 0.0
        %562 = vmatprep.subr.mxu0 0.0
        %563 = vmatpush1.xpose.msra.mxu0 %v530
        %564 = vmatprep.subr.mxu0 0.0
        %565 = vmatpush2.xpose.msra.mxu0 0.0
        %566 = vmatprep.subr.mxu0 0.0
        %567 = vmatpush2.xpose.msra.mxu0 0.0
        %568 = vmatprep.subr.mxu0 0.0
        %569 = vmatpush2.xpose.msra.mxu0 0.0
        %570 = vmatprep.subr.mxu0 0.0
        %571 = vmatpush2.xpose.msra.mxu0 0.0
        %572 = vmatprep.subr.mxu0 0.0
        %573 = vmatpush2.xpose.msra.mxu0 0.0
        %574 = vmatprep.subr.mxu0 0.0
        %575 = vmatpush2.xpose.msra.mxu0 0.0
        %576 = vmatprep.subr.mxu0 0.0
        %577 = vmatpush2.xpose.msra.mxu0 0.0
        %578 = vmatprep.subr.mxu0 0.0
        %579 = vmatpush2.xpose.msra.mxu0 0.0
        %580 = vmatprep.subr.mxu0 0.0
        %581 = vmatpush2.xpose.msra.mxu0 0.0
        %582 = vmatprep.subr.mxu0 0.0
        %583 = vmatpush2.xpose.msra.mxu0 0.0
        %584 = vmatprep.subr.mxu0 0.0
        %585 = vmatpush2.xpose.msra.mxu0 0.0
        %586 = vmatprep.subr.mxu0 0.0
        %587 = vmatpush2.xpose.msra.mxu0 0.0
        %588 = vmatprep.subr.mxu0 0.0
        %589 = vmatpush2.xpose.msra.mxu0 0.0
        %590 = vmatprep.subr.mxu0 0.0
        %591 = vmatpush2.xpose.msra.mxu0 0.0
        %592 = vmatprep.subr.mxu0 0.0
        %593 = vmatpush2.xpose.msra.mxu0 0.0
        %594 = vmatprep.subr.mxu0 0.0
        %595 = vmatpush2.xpose.msra.mxu0 0.0
        %596 = vmatprep.mubr.f32.mxu0 0.0
        %597 = vmatmul.mubr.f32.gmra.mxu0 %v528
        %v598 = vpop.f32.mrf.mxu0
        %v599 = vadd.f32 0.0, %v598
        %v600 = vpop.f32.mrf.mxu0
        %601 = vdwg.mxu0
        %v602 = vsel %vm361, %v599, -inf
        %603 = vmax.xlane.f32.xlu0 %v602
        %v604 = vpop.xlane.xlu0 %603
        %v605 = vsub.f32 %v599, %v604
        %v606 = vmul.f32 %v605, 1.442695
        %v607 = vpow.pop %v606
        %v608 = vsel %vm361, %v607, 0.0
        %609 = vadd.xlane.f32.xlu0 %v608
        %v610 = vpop.xlane.xlu0 %609
        %v611 = vrcp.pop %v610
        %v612 = vmul.f32 %v611, 0.35355338
        %v613 = vmul.f32 %v607, %v612
        %614 = vrot.lane.b32.xlu0 %v357, 56
        %v615 = vpop.permute.xlu0 %614
        %v618 = vsel %vm361, %v613, 0
        %620 = vmatprep.subr.mxu0 0.0
        %621 = vmatpush1.msra.mxu0 0.0
        %622 = vmatprep.subr.mxu0 0.0
        %623 = vmatpush1.msra.mxu0 0.0
        %624 = vmatprep.subr.mxu0 0.0
        %625 = vmatpush1.msra.mxu0 0.0
        %626 = vmatprep.subr.mxu0 0.0
        %627 = vmatpush1.msra.mxu0 0.0
        %628 = vmatprep.subr.mxu0 0.0
        %629 = vmatpush1.msra.mxu0 0.0
        %630 = vmatprep.subr.mxu0 0.0
        %631 = vmatpush1.msra.mxu0 0.0
        %632 = vmatprep.subr.mxu0 0.0
        %633 = vmatpush1.msra.mxu0 0.0
        %634 = vmatprep.subr.mxu0 0.0
        %635 = vmatpush1.msra.mxu0 0.0
        %636 = vmatprep.subr.mxu0 0.0
        %637 = vmatpush1.msra.mxu0 0.0
        %638 = vmatprep.subr.mxu0 0.0
        %639 = vmatpush1.msra.mxu0 0.0
        %640 = vmatprep.subr.mxu0 0.0
        %641 = vmatpush1.msra.mxu0 0.0
        %642 = vmatprep.subr.mxu0 0.0
        %643 = vmatpush1.msra.mxu0 0.0
        %644 = vmatprep.subr.mxu0 0.0
        %645 = vmatpush1.msra.mxu0 0.0
        %646 = vmatprep.subr.mxu0 0.0
        %647 = vmatpush1.msra.mxu0 0.0
        %648 = vmatprep.subr.mxu0 0.0
        %649 = vmatpush1.msra.mxu0 0.0
        %650 = vmatprep.subr.mxu0 0.0
        %651 = vmatpush1.msra.mxu0 %v615
        %652 = vmatprep.subr.mxu0 0.0
        %653 = vmatpush2.msra.mxu0 0.0
        %654 = vmatprep.subr.mxu0 0.0
        %655 = vmatpush2.msra.mxu0 0.0
        %656 = vmatprep.subr.mxu0 0.0
        %657 = vmatpush2.msra.mxu0 0.0
        %658 = vmatprep.subr.mxu0 0.0
        %659 = vmatpush2.msra.mxu0 0.0
        %660 = vmatprep.subr.mxu0 0.0
        %661 = vmatpush2.msra.mxu0 0.0
        %662 = vmatprep.subr.mxu0 0.0
        %663 = vmatpush2.msra.mxu0 0.0
        %664 = vmatprep.subr.mxu0 0.0
        %665 = vmatpush2.msra.mxu0 0.0
        %666 = vmatprep.subr.mxu0 0.0
        %667 = vmatpush2.msra.mxu0 0.0
        %668 = vmatprep.subr.mxu0 0.0
        %669 = vmatpush2.msra.mxu0 0.0
        %670 = vmatprep.subr.mxu0 0.0
        %671 = vmatpush2.msra.mxu0 0.0
        %672 = vmatprep.subr.mxu0 0.0
        %673 = vmatpush2.msra.mxu0 0.0
        %674 = vmatprep.subr.mxu0 0.0
        %675 = vmatpush2.msra.mxu0 0.0
        %676 = vmatprep.subr.mxu0 0.0
        %677 = vmatpush2.msra.mxu0 0.0
        %678 = vmatprep.subr.mxu0 0.0
        %679 = vmatpush2.msra.mxu0 0.0
        %680 = vmatprep.subr.mxu0 0.0
        %681 = vmatpush2.msra.mxu0 0.0
        %682 = vmatprep.subr.mxu0 0.0
        %683 = vmatpush2.msra.mxu0 0.0
        %684 = vmatprep.mubr.f32.mxu0 0.0
        %685 = vmatmul.mubr.f32.gmra.mxu0 %v618
        %v686 = vpop.f32.mrf.mxu0
        %v687 = vadd.f32 0.0, %v686
        %v688 = vpop.f32.mrf.mxu0
        %689 = vdwg.mxu0
        %690 = vrot.lane.b32.xlu0 %v357, 112
        %v691 = vpop.permute.xlu0 %690
        %692 = vrot.lane.b32.xlu0 %v357, 80
        %v693 = vpop.permute.xlu0 %692
        %v694 = vsel %vm361, %v691, 0
        %v696 = vsel %vm361, %v693, 0
        %698 = vmatprep.subr.mxu0 0.0
        %699 = vmatpush1.xpose.msra.mxu0 0.0
        %700 = vmatprep.subr.mxu0 0.0
        %701 = vmatpush1.xpose.msra.mxu0 0.0
        %702 = vmatprep.subr.mxu0 0.0
        %703 = vmatpush1.xpose.msra.mxu0 0.0
        %704 = vmatprep.subr.mxu0 0.0
        %705 = vmatpush1.xpose.msra.mxu0 0.0
        %706 = vmatprep.subr.mxu0 0.0
        %707 = vmatpush1.xpose.msra.mxu0 0.0
        %708 = vmatprep.subr.mxu0 0.0
        %709 = vmatpush1.xpose.msra.mxu0 0.0
        %710 = vmatprep.subr.mxu0 0.0
        %711 = vmatpush1.xpose.msra.mxu0 0.0
        %712 = vmatprep.subr.mxu0 0.0
        %713 = vmatpush1.xpose.msra.mxu0 0.0
        %714 = vmatprep.subr.mxu0 0.0
        %715 = vmatpush1.xpose.msra.mxu0 0.0
        %716 = vmatprep.subr.mxu0 0.0
        %717 = vmatpush1.xpose.msra.mxu0 0.0
        %718 = vmatprep.subr.mxu0 0.0
        %719 = vmatpush1.xpose.msra.mxu0 0.0
        %720 = vmatprep.subr.mxu0 0.0
        %721 = vmatpush1.xpose.msra.mxu0 0.0
        %722 = vmatprep.subr.mxu0 0.0
        %723 = vmatpush1.xpose.msra.mxu0 0.0
        %724 = vmatprep.subr.mxu0 0.0
        %725 = vmatpush1.xpose.msra.mxu0 0.0
        %726 = vmatprep.subr.mxu0 0.0
        %727 = vmatpush1.xpose.msra.mxu0 0.0
        %728 = vmatprep.subr.mxu0 0.0
        %729 = vmatpush1.xpose.msra.mxu0 %v696
        %730 = vmatprep.subr.mxu0 0.0
        %731 = vmatpush2.xpose.msra.mxu0 0.0
        %732 = vmatprep.subr.mxu0 0.0
        %733 = vmatpush2.xpose.msra.mxu0 0.0
        %734 = vmatprep.subr.mxu0 0.0
        %735 = vmatpush2.xpose.msra.mxu0 0.0
        %736 = vmatprep.subr.mxu0 0.0
        %737 = vmatpush2.xpose.msra.mxu0 0.0
        %738 = vmatprep.subr.mxu0 0.0
        %739 = vmatpush2.xpose.msra.mxu0 0.0
        %740 = vmatprep.subr.mxu0 0.0
        %741 = vmatpush2.xpose.msra.mxu0 0.0
        %742 = vmatprep.subr.mxu0 0.0
        %743 = vmatpush2.xpose.msra.mxu0 0.0
        %744 = vmatprep.subr.mxu0 0.0
        %745 = vmatpush2.xpose.msra.mxu0 0.0
        %746 = vmatprep.subr.mxu0 0.0
        %747 = vmatpush2.xpose.msra.mxu0 0.0
        %748 = vmatprep.subr.mxu0 0.0
        %749 = vmatpush2.xpose.msra.mxu0 0.0
        %750 = vmatprep.subr.mxu0 0.0
        %751 = vmatpush2.xpose.msra.mxu0 0.0
        %752 = vmatprep.subr.mxu0 0.0
        %753 = vmatpush2.xpose.msra.mxu0 0.0
        %754 = vmatprep.subr.mxu0 0.0
        %755 = vmatpush2.xpose.msra.mxu0 0.0
        %756 = vmatprep.subr.mxu0 0.0
        %757 = vmatpush2.xpose.msra.mxu0 0.0
        %758 = vmatprep.subr.mxu0 0.0
        %759 = vmatpush2.xpose.msra.mxu0 0.0
        %760 = vmatprep.subr.mxu0 0.0
        %761 = vmatpush2.xpose.msra.mxu0 0.0
        %762 = vmatprep.mubr.f32.mxu0 0.0
        %763 = vmatmul.mubr.f32.gmra.mxu0 %v694
        %v764 = vpop.f32.mrf.mxu0
        %v765 = vadd.f32 0.0, %v764
        %v766 = vpop.f32.mrf.mxu0
        %767 = vdwg.mxu0
        %v768 = vsel %vm361, %v765, -inf
        %769 = vmax.xlane.f32.xlu0 %v768
        %v770 = vpop.xlane.xlu0 %769
        %v771 = vsub.f32 %v765, %v770
        %v772 = vmul.f32 %v771, 1.442695
        %v773 = vpow.pop %v772
        %v774 = vsel %vm361, %v773, 0.0
        %775 = vadd.xlane.f32.xlu0 %v774
        %v776 = vpop.xlane.xlu0 %775
        %v777 = vrcp.pop %v776
        %v778 = vmul.f32 %v777, 0.35355338
        %v779 = vmul.f32 %v773, %v778
        %780 = vrot.lane.b32.xlu0 %v357, 48
        %v781 = vpop.permute.xlu0 %780
        %v784 = vsel %vm361, %v779, 0
        %786 = vmatprep.subr.mxu0 0.0
        %787 = vmatpush1.msra.mxu0 0.0
        %788 = vmatprep.subr.mxu0 0.0
        %789 = vmatpush1.msra.mxu0 0.0
        %790 = vmatprep.subr.mxu0 0.0
        %791 = vmatpush1.msra.mxu0 0.0
        %792 = vmatprep.subr.mxu0 0.0
        %793 = vmatpush1.msra.mxu0 0.0
        %794 = vmatprep.subr.mxu0 0.0
        %795 = vmatpush1.msra.mxu0 0.0
        %796 = vmatprep.subr.mxu0 0.0
        %797 = vmatpush1.msra.mxu0 0.0
        %798 = vmatprep.subr.mxu0 0.0
        %799 = vmatpush1.msra.mxu0 0.0
        %800 = vmatprep.subr.mxu0 0.0
        %801 = vmatpush1.msra.mxu0 0.0
        %802 = vmatprep.subr.mxu0 0.0
        %803 = vmatpush1.msra.mxu0 0.0
        %804 = vmatprep.subr.mxu0 0.0
        %805 = vmatpush1.msra.mxu0 0.0
        %806 = vmatprep.subr.mxu0 0.0
        %807 = vmatpush1.msra.mxu0 0.0
        %808 = vmatprep.subr.mxu0 0.0
        %809 = vmatpush1.msra.mxu0 0.0
        %810 = vmatprep.subr.mxu0 0.0
        %811 = vmatpush1.msra.mxu0 0.0
        %812 = vmatprep.subr.mxu0 0.0
        %813 = vmatpush1.msra.mxu0 0.0
        %814 = vmatprep.subr.mxu0 0.0
        %815 = vmatpush1.msra.mxu0 0.0
        %816 = vmatprep.subr.mxu0 0.0
        %817 = vmatpush1.msra.mxu0 %v781
        %818 = vmatprep.subr.mxu0 0.0
        %819 = vmatpush2.msra.mxu0 0.0
        %820 = vmatprep.subr.mxu0 0.0
        %821 = vmatpush2.msra.mxu0 0.0
        %822 = vmatprep.subr.mxu0 0.0
        %823 = vmatpush2.msra.mxu0 0.0
        %824 = vmatprep.subr.mxu0 0.0
        %825 = vmatpush2.msra.mxu0 0.0
        %826 = vmatprep.subr.mxu0 0.0
        %827 = vmatpush2.msra.mxu0 0.0
        %828 = vmatprep.subr.mxu0 0.0
        %829 = vmatpush2.msra.mxu0 0.0
        %830 = vmatprep.subr.mxu0 0.0
        %831 = vmatpush2.msra.mxu0 0.0
        %832 = vmatprep.subr.mxu0 0.0
        %833 = vmatpush2.msra.mxu0 0.0
        %834 = vmatprep.subr.mxu0 0.0
        %835 = vmatpush2.msra.mxu0 0.0
        %836 = vmatprep.subr.mxu0 0.0
        %837 = vmatpush2.msra.mxu0 0.0
        %838 = vmatprep.subr.mxu0 0.0
        %839 = vmatpush2.msra.mxu0 0.0
        %840 = vmatprep.subr.mxu0 0.0
        %841 = vmatpush2.msra.mxu0 0.0
        %842 = vmatprep.subr.mxu0 0.0
        %843 = vmatpush2.msra.mxu0 0.0
        %844 = vmatprep.subr.mxu0 0.0
        %845 = vmatpush2.msra.mxu0 0.0
        %846 = vmatprep.subr.mxu0 0.0
        %847 = vmatpush2.msra.mxu0 0.0
        %848 = vmatprep.subr.mxu0 0.0
        %849 = vmatpush2.msra.mxu0 0.0
        %850 = vmatprep.mubr.f32.mxu0 0.0
        %851 = vmatmul.mubr.f32.gmra.mxu0 %v784
        %v852 = vpop.f32.mrf.mxu0
        %v853 = vadd.f32 0.0, %v852
        %v854 = vpop.f32.mrf.mxu0
        %855 = vdwg.mxu0
        %856 = vrot.lane.b32.xlu0 %v357, 104
        %v857 = vpop.permute.xlu0 %856
        %858 = vrot.lane.b32.xlu0 %v357, 72
        %v859 = vpop.permute.xlu0 %858
        %v860 = vsel %vm361, %v857, 0
        %v862 = vsel %vm361, %v859, 0
        %864 = vmatprep.subr.mxu0 0.0
        %865 = vmatpush1.xpose.msra.mxu0 0.0
        %866 = vmatprep.subr.mxu0 0.0
        %867 = vmatpush1.xpose.msra.mxu0 0.0
        %868 = vmatprep.subr.mxu0 0.0
        %869 = vmatpush1.xpose.msra.mxu0 0.0
        %870 = vmatprep.subr.mxu0 0.0
        %871 = vmatpush1.xpose.msra.mxu0 0.0
        %872 = vmatprep.subr.mxu0 0.0
        %873 = vmatpush1.xpose.msra.mxu0 0.0
        %874 = vmatprep.subr.mxu0 0.0
        %875 = vmatpush1.xpose.msra.mxu0 0.0
        %876 = vmatprep.subr.mxu0 0.0
        %877 = vmatpush1.xpose.msra.mxu0 0.0
        %878 = vmatprep.subr.mxu0 0.0
        %879 = vmatpush1.xpose.msra.mxu0 0.0
        %880 = vmatprep.subr.mxu0 0.0
        %881 = vmatpush1.xpose.msra.mxu0 0.0
        %882 = vmatprep.subr.mxu0 0.0
        %883 = vmatpush1.xpose.msra.mxu0 0.0
        %884 = vmatprep.subr.mxu0 0.0
        %885 = vmatpush1.xpose.msra.mxu0 0.0
        %886 = vmatprep.subr.mxu0 0.0
        %887 = vmatpush1.xpose.msra.mxu0 0.0
        %888 = vmatprep.subr.mxu0 0.0
        %889 = vmatpush1.xpose.msra.mxu0 0.0
        %890 = vmatprep.subr.mxu0 0.0
        %891 = vmatpush1.xpose.msra.mxu0 0.0
        %892 = vmatprep.subr.mxu0 0.0
        %893 = vmatpush1.xpose.msra.mxu0 0.0
        %894 = vmatprep.subr.mxu0 0.0
        %895 = vmatpush1.xpose.msra.mxu0 %v862
        %896 = vmatprep.subr.mxu0 0.0
        %897 = vmatpush2.xpose.msra.mxu0 0.0
        %898 = vmatprep.subr.mxu0 0.0
        %899 = vmatpush2.xpose.msra.mxu0 0.0
        %900 = vmatprep.subr.mxu0 0.0
        %901 = vmatpush2.xpose.msra.mxu0 0.0
        %902 = vmatprep.subr.mxu0 0.0
        %903 = vmatpush2.xpose.msra.mxu0 0.0
        %904 = vmatprep.subr.mxu0 0.0
        %905 = vmatpush2.xpose.msra.mxu0 0.0
        %906 = vmatprep.subr.mxu0 0.0
        %907 = vmatpush2.xpose.msra.mxu0 0.0
        %908 = vmatprep.subr.mxu0 0.0
        %909 = vmatpush2.xpose.msra.mxu0 0.0
        %910 = vmatprep.subr.mxu0 0.0
        %911 = vmatpush2.xpose.msra.mxu0 0.0
        %912 = vmatprep.subr.mxu0 0.0
        %913 = vmatpush2.xpose.msra.mxu0 0.0
        %914 = vmatprep.subr.mxu0 0.0
        %915 = vmatpush2.xpose.msra.mxu0 0.0
        %916 = vmatprep.subr.mxu0 0.0
        %917 = vmatpush2.xpose.msra.mxu0 0.0
        %918 = vmatprep.subr.mxu0 0.0
        %919 = vmatpush2.xpose.msra.mxu0 0.0
        %920 = vmatprep.subr.mxu0 0.0
        %921 = vmatpush2.xpose.msra.mxu0 0.0
        %922 = vmatprep.subr.mxu0 0.0
        %923 = vmatpush2.xpose.msra.mxu0 0.0
        %924 = vmatprep.subr.mxu0 0.0
        %925 = vmatpush2.xpose.msra.mxu0 0.0
        %926 = vmatprep.subr.mxu0 0.0
        %927 = vmatpush2.xpose.msra.mxu0 0.0
        %928 = vmatprep.mubr.f32.mxu0 0.0
        %929 = vmatmul.mubr.f32.gmra.mxu0 %v860
        %v930 = vpop.f32.mrf.mxu0
        %v931 = vadd.f32 0.0, %v930
        %v932 = vpop.f32.mrf.mxu0
        %933 = vdwg.mxu0
        %v934 = vsel %vm361, %v931, -inf
        %935 = vmax.xlane.f32.xlu0 %v934
        %v936 = vpop.xlane.xlu0 %935
        %v937 = vsub.f32 %v931, %v936
        %v938 = vmul.f32 %v937, 1.442695
        %v939 = vpow.pop %v938
        %v940 = vsel %vm361, %v939, 0.0
        %941 = vadd.xlane.f32.xlu0 %v940
        %v942 = vpop.xlane.xlu0 %941
        %v943 = vrcp.pop %v942
        %v944 = vmul.f32 %v943, 0.35355338
        %v945 = vmul.f32 %v939, %v944
        %946 = vrot.lane.b32.xlu0 %v357, 40
        %v947 = vpop.permute.xlu0 %946
        %v950 = vsel %vm361, %v945, 0
        %952 = vmatprep.subr.mxu0 0.0
        %953 = vmatpush1.msra.mxu0 0.0
        %954 = vmatprep.subr.mxu0 0.0
        %955 = vmatpush1.msra.mxu0 0.0
        %956 = vmatprep.subr.mxu0 0.0
        %957 = vmatpush1.msra.mxu0 0.0
        %958 = vmatprep.subr.mxu0 0.0
        %959 = vmatpush1.msra.mxu0 0.0
        %960 = vmatprep.subr.mxu0 0.0
        %961 = vmatpush1.msra.mxu0 0.0
        %962 = vmatprep.subr.mxu0 0.0
        %963 = vmatpush1.msra.mxu0 0.0
        %964 = vmatprep.subr.mxu0 0.0
        %965 = vmatpush1.msra.mxu0 0.0
        %966 = vmatprep.subr.mxu0 0.0
        %967 = vmatpush1.msra.mxu0 0.0
        %968 = vmatprep.subr.mxu0 0.0
        %969 = vmatpush1.msra.mxu0 0.0
        %970 = vmatprep.subr.mxu0 0.0
        %971 = vmatpush1.msra.mxu0 0.0
        %972 = vmatprep.subr.mxu0 0.0
        %973 = vmatpush1.msra.mxu0 0.0
        %974 = vmatprep.subr.mxu0 0.0
        %975 = vmatpush1.msra.mxu0 0.0
        %976 = vmatprep.subr.mxu0 0.0
        %977 = vmatpush1.msra.mxu0 0.0
        %978 = vmatprep.subr.mxu0 0.0
        %979 = vmatpush1.msra.mxu0 0.0
        %980 = vmatprep.subr.mxu0 0.0
        %981 = vmatpush1.msra.mxu0 0.0
        %982 = vmatprep.subr.mxu0 0.0
        %983 = vmatpush1.msra.mxu0 %v947
        %984 = vmatprep.subr.mxu0 0.0
        %985 = vmatpush2.msra.mxu0 0.0
        %986 = vmatprep.subr.mxu0 0.0
        %987 = vmatpush2.msra.mxu0 0.0
        %988 = vmatprep.subr.mxu0 0.0
        %989 = vmatpush2.msra.mxu0 0.0
        %990 = vmatprep.subr.mxu0 0.0
        %991 = vmatpush2.msra.mxu0 0.0
        %992 = vmatprep.subr.mxu0 0.0
        %993 = vmatpush2.msra.mxu0 0.0
        %994 = vmatprep.subr.mxu0 0.0
        %995 = vmatpush2.msra.mxu0 0.0
        %996 = vmatprep.subr.mxu0 0.0
        %997 = vmatpush2.msra.mxu0 0.0
        %998 = vmatprep.subr.mxu0 0.0
        %999 = vmatpush2.msra.mxu0 0.0
        %1000 = vmatprep.subr.mxu0 0.0
        %1001 = vmatpush2.msra.mxu0 0.0
        %1002 = vmatprep.subr.mxu0 0.0
        %1003 = vmatpush2.msra.mxu0 0.0
        %1004 = vmatprep.subr.mxu0 0.0
        %1005 = vmatpush2.msra.mxu0 0.0
        %1006 = vmatprep.subr.mxu0 0.0
        %1007 = vmatpush2.msra.mxu0 0.0
        %1008 = vmatprep.subr.mxu0 0.0
        %1009 = vmatpush2.msra.mxu0 0.0
        %1010 = vmatprep.subr.mxu0 0.0
        %1011 = vmatpush2.msra.mxu0 0.0
        %1012 = vmatprep.subr.mxu0 0.0
        %1013 = vmatpush2.msra.mxu0 0.0
        %1014 = vmatprep.subr.mxu0 0.0
        %1015 = vmatpush2.msra.mxu0 0.0
        %1016 = vmatprep.mubr.f32.mxu0 0.0
        %1017 = vmatmul.mubr.f32.gmra.mxu0 %v950
        %v1018 = vpop.f32.mrf.mxu0
        %v1019 = vadd.f32 0.0, %v1018
        %v1020 = vpop.f32.mrf.mxu0
        %1021 = vdwg.mxu0
        %1023 = vrot.lane.b32.xlu0 %v687, 8
        %v1024 = vpop.permute.xlu0 %1023
        %1027 = vrot.lane.b32.xlu0 %v853, 16
        %v1028 = vpop.permute.xlu0 %1027
        %1031 = vrot.lane.b32.xlu0 %v1019, 24
        %v1032 = vpop.permute.xlu0 %1031
        %v1034 = vsel %vm361, %v521, %v1024
        %vm1035 = vcmask 130048
        %v1036 = vsel %vm1035, %v1034, %v1028
        %vm1037 = vcmask 195584
        %v1038 = vsel %vm1037, %v1036, %v1032
        %1039 = vst.msk [vmem:[#allocation3] sm:$0xff] %vm281, %v1038
        %v1040 = vld [vmem:[#allocation3] sm:$0xff]
        %v1041 = vld [vmem:[#allocation9] sm:$0xff]
        %v1042 = vld [vmem:[#allocation9 + $0x8] sm:$0xff]
        %v1043 = vld [vmem:[#allocation9 + $0x10] sm:$0xff]
        %v1044 = vld [vmem:[#allocation9 + $0x18] sm:$0xff]
        %v1045 = vld [vmem:[%s4] sm:$0x1]
        %v1047 = vlaneseq
        %v1048 = vshrl.u32 %v1047, 7
        %v1049 = vsub.s32 0, %v1048
        %v1050 = vrot.slane %v1045, %v1049
        %v1053 = vsel %vm281, %v1040, 0
        %1055 = vmatprep.subr.mxu0 0.0
        %1056 = vmatpush1.msra.mxu0 0.0
        %1057 = vmatprep.subr.mxu0 0.0
        %1058 = vmatpush1.msra.mxu0 0.0
        %1059 = vmatprep.subr.mxu0 0.0
        %1060 = vmatpush1.msra.mxu0 0.0
        %1061 = vmatprep.subr.mxu0 0.0
        %1062 = vmatpush1.msra.mxu0 0.0
        %1063 = vmatprep.subr.mxu0 0.0
        %1064 = vmatpush1.msra.mxu0 0.0
        %1065 = vmatprep.subr.mxu0 0.0
        %1066 = vmatpush1.msra.mxu0 0.0
        %1067 = vmatprep.subr.mxu0 0.0
        %1068 = vmatpush1.msra.mxu0 0.0
        %1069 = vmatprep.subr.mxu0 0.0
        %1070 = vmatpush1.msra.mxu0 0.0
        %1071 = vmatprep.subr.mxu0 0.0
        %1072 = vmatpush1.msra.mxu0 0.0
        %1073 = vmatprep.subr.mxu0 0.0
        %1074 = vmatpush1.msra.mxu0 0.0
        %1075 = vmatprep.subr.mxu0 0.0
        %1076 = vmatpush1.msra.mxu0 0.0
        %1077 = vmatprep.subr.mxu0 0.0
        %1078 = vmatpush1.msra.mxu0 0.0
        %1079 = vmatprep.subr.mxu0 0.0
        %1080 = vmatpush1.msra.mxu0 %v1044
        %1081 = vmatprep.subr.mxu0 0.0
        %1082 = vmatpush1.msra.mxu0 %v1043
        %1083 = vmatprep.subr.mxu0 0.0
        %1084 = vmatpush1.msra.mxu0 %v1042
        %1085 = vmatprep.subr.mxu0 0.0
        %1086 = vmatpush1.msra.mxu0 %v1041
        %1087 = vmatprep.subr.mxu0 0.0
        %1088 = vmatpush2.msra.mxu0 0.0
        %1089 = vmatprep.subr.mxu0 0.0
        %1090 = vmatpush2.msra.mxu0 0.0
        %1091 = vmatprep.subr.mxu0 0.0
        %1092 = vmatpush2.msra.mxu0 0.0
        %1093 = vmatprep.subr.mxu0 0.0
        %1094 = vmatpush2.msra.mxu0 0.0
        %1095 = vmatprep.subr.mxu0 0.0
        %1096 = vmatpush2.msra.mxu0 0.0
        %1097 = vmatprep.subr.mxu0 0.0
        %1098 = vmatpush2.msra.mxu0 0.0
        %1099 = vmatprep.subr.mxu0 0.0
        %1100 = vmatpush2.msra.mxu0 0.0
        %1101 = vmatprep.subr.mxu0 0.0
        %1102 = vmatpush2.msra.mxu0 0.0
        %1103 = vmatprep.subr.mxu0 0.0
        %1104 = vmatpush2.msra.mxu0 0.0
        %1105 = vmatprep.subr.mxu0 0.0
        %1106 = vmatpush2.msra.mxu0 0.0
        %1107 = vmatprep.subr.mxu0 0.0
        %1108 = vmatpush2.msra.mxu0 0.0
        %1109 = vmatprep.subr.mxu0 0.0
        %1110 = vmatpush2.msra.mxu0 0.0
        %1111 = vmatprep.subr.mxu0 0.0
        %1112 = vmatpush2.msra.mxu0 0.0
        %1113 = vmatprep.subr.mxu0 0.0
        %1114 = vmatpush2.msra.mxu0 0.0
        %1115 = vmatprep.subr.mxu0 0.0
        %1116 = vmatpush2.msra.mxu0 0.0
        %1117 = vmatprep.subr.mxu0 0.0
        %1118 = vmatpush2.msra.mxu0 0.0
        %1119 = vmatprep.mubr.f32.mxu0 0.0
        %1120 = vmatmul.mubr.f32.gmra.mxu0 %v1053
        %v1121 = vpop.f32.mrf.mxu0
        %v1122 = vadd.f32 %v1050, %v1121
        %v1123 = vpop.f32.mrf.mxu0
        %1124 = vdwg.mxu0
        %1125 = vst.msk [vmem:[%s268] sm:$0xff] %vm281, %v1122
        %s1126 = sand.u32 %s141, 1
        %s1127 = scalar_lea.sflag [#allocation6], %s1126
        %s1128 = sand.u32 %s141, 1
        %s1129 = smul.addr %s1128, 8
        %s1130 = scalar_lea.vmem [#allocation10], %s1129
        // Predicated region
        $region53: #{tpu_custom_call.1} parent=39 // pred_check
          %p1131 = pneg %p151
        $region54: #{tpu_custom_call.1} parent=39 // pred_check_branch
          %1133 = sbr.rel (%p1131) target = $region56
        $region55: #{tpu_custom_call.1} parent=39 // pred_region
          %s1135 = ssub.s32 128, 128
          %1136 = vsyncadd %s1127, %s1135
          %s1137 = smul.addr %s23, 128
          %s1138 = scalar_lea.hbm %s5, %s1137
          %s1140 = sshll.u32 %s1130, 4
          %s1141 = int_to_ptr.vmem [resolvable:$true] %s1140
          %1143 = dma.vmem_to_hbm [thread:$0]  %s1141, 128, %s1138, %s1127
        $region56: #{tpu_custom_call.1} parent=39 // pred_fallthru
          _
      $region40: #{tpu_custom_call.1} parent=5 // pred_fallthru
        _
      %p1144 = scmp.le.s32.totalorder 2, %s18
      // Predicated region
      $region57: #{tpu_custom_call.1} parent=5 // pred_check
        %p1145 = pneg %p1144
      $region58: #{tpu_custom_call.1} parent=5 // pred_check_branch
        %1147 = sbr.rel (%p1145) target = $region60
      $region59: #{tpu_custom_call.1} parent=5 // pred_region
        %s1148 = ssub.s32 %s18, 2
        // Predicated region
        $region61: #{tpu_custom_call.1} parent=59 // pred_check
          %p1149 = pneg %p157
        $region62: #{tpu_custom_call.1} parent=59 // pred_check_branch
          %1151 = sbr.rel (%p1149) target = $region64
        $region63: #{tpu_custom_call.1} parent=59 // pred_region
          %s1152 = sand.u32 %s142, 1
          %s1153 = scalar_lea.sflag [#allocation6], %s1152
          %s1154 = sand.u32 %s142, 1
          %s1155 = smul.addr %s1154, 8
          %s1156 = scalar_lea.vmem [#allocation10], %s1155
          %1157 = dma.done %s1153, 128
        $region64: #{tpu_custom_call.1} parent=59 // pred_fallthru
          _
      $region60: #{tpu_custom_call.1} parent=5 // pred_fallthru
        _
    $region6: #{tpu_custom_call.1} parent=1 // loop_footer
      %s22 = sadd.s32 1, %s18
    $region7: #{tpu_custom_call.1} parent=1 // loop_footer_branch
      %17 = sbr.rel target = $region3
    $region8: #{tpu_custom_call.1} parent=1 // loop_exit
      _
    %1158 = vsyncpa [#allocation5], 1
    %s1159 = scalar_lea.sflag [#allocation5], 1
    %1160 = vsyncpa %s1159, 1
    %1161 = vsyncpa [#allocation8], 1
    %1162 = vsyncpa [#allocation6], 1
    %s1163 = scalar_lea.sflag [#allocation6], 1
    %1164 = vsyncpa %s1163, 1

</llo_original>
